<compile_context>
chip_gen: v6e
topology: v6e:2x2x1
jax: 0.10.0
libtpu: 0.0.40
codegen_flags: <defaults>
</compile_context>

<pallas_src>
from functools import partial

import jax
import jax.numpy as jnp
from jax.experimental import pallas as pl
from jax.experimental.pallas import tpu as pltpu


def _conv_sigmoid_finalize(w_ref, sum_ref, max_ref, pad_ref, o_ref, *, K, P, H, W):
    """Scatter flat reduced maps into the padded scratch, KxK conv, sigmoid, store."""
    # Row-wise scatter of the flat (1, H*W) maps into the zero-padded 2-D scratch.
    # (Avoids an in-kernel (1, H*W) <-> (H, W) value reshape/relayout.)
    for c, src in enumerate((sum_ref, max_ref)):
        for y in range(H):
            pad_ref[c, P + y:P + y + 1, P:P + W] = src[0:1, y * W:(y + 1) * W]

    # KxK conv as VPU shift-and-accumulate: one padded row-band load per (c, ky);
    # the K kx-shifted windows come from the in-register band value.
    # TODO(synk): for large H*W, tile this over row bands and use pltpu.roll for
    # the kx shifts to keep the accumulator in registers.
    acc = jnp.zeros((H, W), jnp.float32)
    for c in range(2):
        for ky in range(K):
            band = pad_ref[c, ky:ky + H, :]              # (H, W + 2P)
            for kx in range(K):
                wv = w_ref[c * K * K + ky * K + kx]
                acc = acc + wv * band[:, kx:kx + W]

    # TODO(synk): lane-dense (multiple-of-128) output store; kept (1, H, W)
    # blocks to avoid an in-kernel (H, W) -> (1, H*W) relayout.
    o_ref[...] = jax.nn.sigmoid(acc)[None, :, :].astype(o_ref.dtype)


def _ssp_kernel_single(w_ref, x_ref, o_ref, sum_ref, max_ref, pad_ref, *, K, P, H, W):
    # Whole (C, H*W) slab per grid step: no accumulation branches.
    x = x_ref[...]                                                    # (C, H*W), lane-dense
    max_ref[...] = jnp.max(x, axis=0, keepdims=True).astype(jnp.float32)
    sum_ref[...] = jnp.sum(x.astype(jnp.float32), axis=0, keepdims=True)
    pad_ref[...] = jnp.zeros_like(pad_ref)                            # halo must be zero
    _conv_sigmoid_finalize(w_ref, sum_ref, max_ref, pad_ref, o_ref, K=K, P=P, H=H, W=W)


def _ssp_kernel_chunked(w_ref, x_ref, o_ref, sum_ref, max_ref, pad_ref, *, K, P, H, W):
    # grid = (N, C // CB).  The output block is resident across the kc axis
    # (its index_map is constant along kc), so kc MUST stay "arbitrary" and
    # innermost — do not reorder the grid or flip it to "parallel".
    kc = pl.program_id(1)
    n_kc = pl.num_programs(1)

    x = x_ref[...]                                                    # (CB, H*W), lane-dense
    cmax = jnp.max(x, axis=0, keepdims=True).astype(jnp.float32)      # native-dtype max, one upcast
    csum = jnp.sum(x.astype(jnp.float32), axis=0, keepdims=True)      # f32 accumulation

    @pl.when(kc == 0)
    def _init():
        pad_ref[...] = jnp.zeros_like(pad_ref)                        # per-sample; halo stays zero
        sum_ref[...] = csum
        max_ref[...] = cmax

    @pl.when(kc > 0)
    def _accumulate():
        sum_ref[...] = sum_ref[...] + csum
        max_ref[...] = jnp.maximum(max_ref[...], cmax)

    @pl.when(kc == n_kc - 1)
    def _finalize():
        _conv_sigmoid_finalize(w_ref, sum_ref, max_ref, pad_ref, o_ref, K=K, P=P, H=H, W=W)


def _default_target_block_bytes():
    """Per-generation input-block budget (v7x: 64 MiB VMEM/TC vs 128 MiB on v5e/v6e)."""
    try:
        kind = jax.devices()[0].device_kind.lower()
    except Exception:
        kind = ""
    return (4 << 20) if ("v7" in kind or "7x" in kind) else (8 << 20)


def _pick_channel_chunk(C, HW, itemsize, target_bytes):
    """Largest divisor CB of C with CB*HW*itemsize <= target_bytes.

    Prefers multiples of 8 so the (CB, H*W) block respects the (8, 128) tiling
    rule on the second-minor dim.  Divisor-only chunking degrades for prime C;
    acceptable here since the chunked path is only taken for large C."""
    budget = max(1, target_bytes // (HW * itemsize))
    best = 0
    for d in range(1, C + 1):
        if C % d == 0 and d <= budget and d % 8 == 0:
            best = max(best, d)
    if best == 0:
        for d in range(1, C + 1):
            if C % d == 0 and d <= budget:
                best = max(best, d)
    return max(best, 1)


def ssp_forward(x, w, kernel_size=7, *, target_block_bytes=None, vmem_limit_bytes=48 << 20):
    """x: (N, C, H, W); w: (1, 2, K, K) OIHW conv weight. Returns (N, 1, H, W)."""
    assert kernel_size in (3, 7, 11), "kernel must be 3 or 7 or 11"
    N, C, H, W = x.shape
    K = kernel_size
    P = K // 2
    HW = H * W
    itemsize = int(jnp.dtype(x.dtype).itemsize)
    if target_block_bytes is None:
        target_block_bytes = _default_target_block_bytes()

    # Fold 1/C of the channel mean into the avg-channel (cin=0) weights: the
    # kernel then only accumulates a raw channel sum (zero halo unaffected).
    w_scaled = w.astype(jnp.float32)
    w_scaled = w_scaled.at[:, 0].multiply(1.0 / C)
    w_flat = w_scaled.reshape(-1)                     # (2*K*K,), ordered (cin, ky, kx)

    # Lane-dense view of the input: free reshape for contiguous NCHW.
    x_flat = x.reshape(N, C, HW)

    cost = pl.CostEstimate(
        flops=2 * N * (C + 2 * K * K) * HW,
        transcendentals=N * HW,                       # sigmoid
        bytes_accessed=N * C * HW * itemsize + N * HW * itemsize + 2 * K * K * 4,
    )
    out_shape = jax.ShapeDtypeStruct((N, 1, H, W), x.dtype)
    w_spec = pl.BlockSpec(memory_space=pltpu.SMEM)
    scratch = [
        pltpu.VMEM((1, HW), jnp.float32),                       # channel-sum accumulator
        pltpu.VMEM((1, HW), jnp.float32),                       # channel-max accumulator
        pltpu.VMEM((2, H + 2 * P, W + 2 * P), jnp.float32),     # zero-padded conv scratch
    ]

    if C * HW * itemsize <= target_block_bytes:
        # Single-pass: whole channel dim per sample, grid=(N,), no accumulation branches.
        # TODO(synk): for v7x with N == 1 one TensorCore idles; split H row-bands
        # across cores for the reduction to use both cores.
        kern = partial(_ssp_kernel_single, K=K, P=P, H=H, W=W)
        out = pl.pallas_call(
            kern,
            out_shape=out_shape,
            grid=(N,),
            in_specs=[
                w_spec,
                pl.BlockSpec((pl.Squeezed(), C, HW), lambda n: (n, 0, 0)),
            ],
            out_specs=pl.BlockSpec((pl.Squeezed(), 1, H, W), lambda n: (n, 0, 0, 0)),
            scratch_shapes=scratch,
            compiler_params=pltpu.CompilerParams(
                dimension_semantics=("parallel",),
                vmem_limit_bytes=vmem_limit_bytes),
            cost_estimate=cost,
        )(w_flat, x_flat)
    else:
        CB = _pick_channel_chunk(C, HW, itemsize, target_block_bytes)
        n_kc = C // CB
        kern = partial(_ssp_kernel_chunked, K=K, P=P, H=H, W=W)
        out = pl.pallas_call(
            kern,
            out_shape=out_shape,
            grid=(N, n_kc),
            in_specs=[
                w_spec,
                pl.BlockSpec((pl.Squeezed(), CB, HW), lambda n, kc: (n, kc, 0)),
            ],
            # Constant along kc => output block resident across the reduction axis.
            out_specs=pl.BlockSpec((pl.Squeezed(), 1, H, W), lambda n, kc: (n, 0, 0, 0)),
            scratch_shapes=scratch,
            compiler_params=pltpu.CompilerParams(
                dimension_semantics=("parallel", "arbitrary"),
                vmem_limit_bytes=vmem_limit_bytes),
            cost_estimate=cost,
        )(w_flat, x_flat)

    return out


def ssp_reference(x, w, kernel_size=7):
    """Pure-JAX reference mirroring the PyTorch forward."""
    P = kernel_size // 2
    avg = jnp.mean(x, axis=1, keepdims=True)
    mx = jnp.max(x, axis=1, keepdims=True)
    feat = jnp.concatenate([avg, mx], axis=1)
    conv = jax.lax.conv_general_dilated(
        feat, w, window_strides=(1, 1), padding=[(P, P), (P, P)],
        dimension_numbers=("NCHW", "OIHW", "NCHW"))
    return jax.nn.sigmoid(conv)


if __name__ == "__main__":
    key = jax.random.PRNGKey(0)
    kx, kw, kx2, kw2 = jax.random.split(key, 4)

    K = 7

    # --- Test 1: small shapes consistent with the module (single-pass path). ---
    N, C, H, W = 2, 4, 16, 16
    x = jax.random.normal(kx, (N, C, H, W), dtype=jnp.float32)
    # Deterministic init matching init_weights('normal'): N(0, 0.02), bias=False.
    w = jax.random.normal(kw, (1, 2, K, K), dtype=jnp.float32) * 0.02

    out = jax.block_until_ready(ssp_forward(x, w, kernel_size=K))
    ref = ssp_reference(x, w, kernel_size=K)
    assert out.shape == (N, 1, H, W), out.shape
    assert jnp.allclose(out, ref, atol=1e-5, rtol=1e-4), float(jnp.max(jnp.abs(out - ref)))

    # --- Test 2: larger channel count with a small block budget to exercise the
    # chunked (grid=(N, C/CB)) reduction path. ---
    N2, C2 = 1, 64
    x2 = jax.random.normal(kx2, (N2, C2, H, W), dtype=jnp.float32)
    w2 = jax.random.normal(kw2, (1, 2, K, K), dtype=jnp.float32) * 0.02

    out2 = jax.block_until_ready(
        ssp_forward(x2, w2, kernel_size=K, target_block_bytes=32 * 1024))
    ref2 = ssp_reference(x2, w2, kernel_size=K)
    assert out2.shape == (N2, 1, H, W), out2.shape
    assert jnp.allclose(out2, ref2, atol=1e-5, rtol=1e-4), float(jnp.max(jnp.abs(out2 - ref2)))

    print("KERNEL_OK")
</pallas_src>

<mosaic_0001>
module attributes {stable_mosaic.version = 11 : i64} {
  func.func @_ssp_kernel_single(%arg0: i32, %arg1: memref<98xf32, #tpu.memory_space<smem>>, %arg2: memref<1x4x256xf32, #tpu.memory_space<vmem>>, %arg3: memref<1x1x16x16xf32, #tpu.memory_space<vmem>>, %arg4: memref<1x256xf32, #tpu.memory_space<vmem>>, %arg5: memref<1x256xf32, #tpu.memory_space<vmem>>, %arg6: memref<2x22x22xf32, #tpu.memory_space<vmem>>) attributes {dimension_semantics = [#tpu.dimension_semantics<parallel>], iteration_bounds = array<i64: 2>, scalar_prefetch = 0 : i64, scratch_operands = 3 : i64, tpu.core_type = #tpu.core_type<tc>, window_params = [{transform_indices = @transform_0, window_bounds = array<i64: 98>}, {transform_indices = @transform_1, window_bounds = array<i64: 1, 4, 256>}, {transform_indices = @transform_2, window_bounds = array<i64: 1, 1, 16, 16>}]} {
    %c0 = arith.constant 0 : index
    %c0_0 = arith.constant 0 : index
    %c0_1 = arith.constant 0 : index
    %0 = vector.load %arg2[%c0, %c0_0, %c0_1] : memref<1x4x256xf32, #tpu.memory_space<vmem>>, vector<1x4x256xf32>
    %1 = vector.shape_cast %0 : vector<1x4x256xf32> to vector<4x256xf32>
    %cst = arith.constant dense<0xFF800000> : vector<256xf32>
    %2 = vector.multi_reduction <maximumf>, %1, %cst [0] : vector<4x256xf32> to vector<256xf32>
    %3 = vector.shape_cast %2 : vector<256xf32> to vector<1x256xf32>
    %c0_2 = arith.constant 0 : index
    %c0_3 = arith.constant 0 : index
    %4 = vector.load %arg5[%c0_2, %c0_3] : memref<1x256xf32, #tpu.memory_space<vmem>>, vector<1x256xf32>
    tpu.vector_store %arg5[%c0_2, %c0_3], %3 {strides = array<i32>} : memref<1x256xf32, #tpu.memory_space<vmem>>, vector<1x256xf32>,
    %cst_4 = arith.constant dense<0.000000e+00> : vector<256xf32>
    %5 = vector.multi_reduction <add>, %1, %cst_4 [0] : vector<4x256xf32> to vector<256xf32>
    %6 = vector.shape_cast %5 : vector<256xf32> to vector<1x256xf32>
    %c0_5 = arith.constant 0 : index
    %c0_6 = arith.constant 0 : index
    %7 = vector.load %arg4[%c0_5, %c0_6] : memref<1x256xf32, #tpu.memory_space<vmem>>, vector<1x256xf32>
    tpu.vector_store %arg4[%c0_5, %c0_6], %6 {strides = array<i32>} : memref<1x256xf32, #tpu.memory_space<vmem>>, vector<1x256xf32>,
    %cst_7 = arith.constant 0.000000e+00 : f32
    %8 = vector.broadcast %cst_7 : f32 to vector<2x22x22xf32>
    %c0_8 = arith.constant 0 : index
    %c0_9 = arith.constant 0 : index
    %c0_10 = arith.constant 0 : index
    %9 = vector.load %arg6[%c0_8, %c0_9, %c0_10] : memref<2x22x22xf32, #tpu.memory_space<vmem>>, vector<2x22x22xf32>
    tpu.vector_store %arg6[%c0_8, %c0_9, %c0_10], %8 {strides = array<i32>} : memref<2x22x22xf32, #tpu.memory_space<vmem>>, vector<2x22x22xf32>,
    %c0_11 = arith.constant 0 : index
    %c0_12 = arith.constant 0 : index
    %10 = vector.load %arg4[%c0_11, %c0_12] : memref<1x256xf32, #tpu.memory_space<vmem>>, vector<1x16xf32>
    %c0_13 = arith.constant 0 : index
    %c3 = arith.constant 3 : index
    %c3_14 = arith.constant 3 : index
    %11 = vector.load %arg6[%c0_13, %c3, %c3_14] : memref<2x22x22xf32, #tpu.memory_space<vmem>>, vector<1x1x16xf32>
    %12 = vector.shape_cast %11 : vector<1x1x16xf32> to vector<1x16xf32>
    %13 = vector.shape_cast %10 : vector<1x16xf32> to vector<1x1x16xf32>
    tpu.vector_store %arg6[%c0_13, %c3, %c3_14], %13 {strides = array<i32>} : memref<2x22x22xf32, #tpu.memory_space<vmem>>, vector<1x1x16xf32>,
    %c0_15 = arith.constant 0 : index
    %c16 = arith.constant 16 : index
    %14 = vector.load %arg4[%c0_15, %c16] : memref<1x256xf32, #tpu.memory_space<vmem>>, vector<1x16xf32>
    %c0_16 = arith.constant 0 : index
    %c4 = arith.constant 4 : index
    %c3_17 = arith.constant 3 : index
    %15 = vector.load %arg6[%c0_16, %c4, %c3_17] : memref<2x22x22xf32, #tpu.memory_space<vmem>>, vector<1x1x16xf32>
    %16 = vector.shape_cast %15 : vector<1x1x16xf32> to vector<1x16xf32>
    %17 = vector.shape_cast %14 : vector<1x16xf32> to vector<1x1x16xf32>
    tpu.vector_store %arg6[%c0_16, %c4, %c3_17], %17 {strides = array<i32>} : memref<2x22x22xf32, #tpu.memory_space<vmem>>, vector<1x1x16xf32>,
    %c0_18 = arith.constant 0 : index
    %c32 = arith.constant 32 : index
    %18 = vector.load %arg4[%c0_18, %c32] : memref<1x256xf32, #tpu.memory_space<vmem>>, vector<1x16xf32>
    %c0_19 = arith.constant 0 : index
    %c5 = arith.constant 5 : index
    %c3_20 = arith.constant 3 : index
    %19 = vector.load %arg6[%c0_19, %c5, %c3_20] : memref<2x22x22xf32, #tpu.memory_space<vmem>>, vector<1x1x16xf32>
    %20 = vector.shape_cast %19 : vector<1x1x16xf32> to vector<1x16xf32>
    %21 = vector.shape_cast %18 : vector<1x16xf32> to vector<1x1x16xf32>
    tpu.vector_store %arg6[%c0_19, %c5, %c3_20], %21 {strides = array<i32>} : memref<2x22x22xf32, #tpu.memory_space<vmem>>, vector<1x1x16xf32>,
    %c0_21 = arith.constant 0 : index
    %c48 = arith.constant 48 : index
    %22 = vector.load %arg4[%c0_21, %c48] : memref<1x256xf32, #tpu.memory_space<vmem>>, vector<1x16xf32>
    %c0_22 = arith.constant 0 : index
    %c6 = arith.constant 6 : index
    %c3_23 = arith.constant 3 : index
    %23 = vector.load %arg6[%c0_22, %c6, %c3_23] : memref<2x22x22xf32, #tpu.memory_space<vmem>>, vector<1x1x16xf32>
    %24 = vector.shape_cast %23 : vector<1x1x16xf32> to vector<1x16xf32>
    %25 = vector.shape_cast %22 : vector<1x16xf32> to vector<1x1x16xf32>
    tpu.vector_store %arg6[%c0_22, %c6, %c3_23], %25 {strides = array<i32>} : memref<2x22x22xf32, #tpu.memory_space<vmem>>, vector<1x1x16xf32>,
    %c0_24 = arith.constant 0 : index
    %c64 = arith.constant 64 : index
    %26 = vector.load %arg4[%c0_24, %c64] : memref<1x256xf32, #tpu.memory_space<vmem>>, vector<1x16xf32>
    %c0_25 = arith.constant 0 : index
    %c7 = arith.constant 7 : index
    %c3_26 = arith.constant 3 : index
    %27 = vector.load %arg6[%c0_25, %c7, %c3_26] : memref<2x22x22xf32, #tpu.memory_space<vmem>>, vector<1x1x16xf32>
    %28 = vector.shape_cast %27 : vector<1x1x16xf32> to vector<1x16xf32>
    %29 = vector.shape_cast %26 : vector<1x16xf32> to vector<1x1x16xf32>
    tpu.vector_store %arg6[%c0_25, %c7, %c3_26], %29 {strides = array<i32>} : memref<2x22x22xf32, #tpu.memory_space<vmem>>, vector<1x1x16xf32>,
    %c0_27 = arith.constant 0 : index
    %c80 = arith.constant 80 : index
    %30 = vector.load %arg4[%c0_27, %c80] : memref<1x256xf32, #tpu.memory_space<vmem>>, vector<1x16xf32>
    %c0_28 = arith.constant 0 : index
    %c8 = arith.constant 8 : index
    %c3_29 = arith.constant 3 : index
    %31 = vector.load %arg6[%c0_28, %c8, %c3_29] : memref<2x22x22xf32, #tpu.memory_space<vmem>>, vector<1x1x16xf32>
    %32 = vector.shape_cast %31 : vector<1x1x16xf32> to vector<1x16xf32>
    %33 = vector.shape_cast %30 : vector<1x16xf32> to vector<1x1x16xf32>
    tpu.vector_store %arg6[%c0_28, %c8, %c3_29], %33 {strides = array<i32>} : memref<2x22x22xf32, #tpu.memory_space<vmem>>, vector<1x1x16xf32>,
    %c0_30 = arith.constant 0 : index
    %c96 = arith.constant 96 : index
    %34 = vector.load %arg4[%c0_30, %c96] : memref<1x256xf32, #tpu.memory_space<vmem>>, vector<1x16xf32>
    %c0_31 = arith.constant 0 : index
    %c9 = arith.constant 9 : index
    %c3_32 = arith.constant 3 : index
    %35 = vector.load %arg6[%c0_31, %c9, %c3_32] : memref<2x22x22xf32, #tpu.memory_space<vmem>>, vector<1x1x16xf32>
    %36 = vector.shape_cast %35 : vector<1x1x16xf32> to vector<1x16xf32>
    %37 = vector.shape_cast %34 : vector<1x16xf32> to vector<1x1x16xf32>
    tpu.vector_store %arg6[%c0_31, %c9, %c3_32], %37 {strides = array<i32>} : memref<2x22x22xf32, #tpu.memory_space<vmem>>, vector<1x1x16xf32>,
    %c0_33 = arith.constant 0 : index
    %c112 = arith.constant 112 : index
    %38 = vector.load %arg4[%c0_33, %c112] : memref<1x256xf32, #tpu.memory_space<vmem>>, vector<1x16xf32>
    %c0_34 = arith.constant 0 : index
    %c10 = arith.constant 10 : index
    %c3_35 = arith.constant 3 : index
    %39 = vector.load %arg6[%c0_34, %c10, %c3_35] : memref<2x22x22xf32, #tpu.memory_space<vmem>>, vector<1x1x16xf32>
    %40 = vector.shape_cast %39 : vector<1x1x16xf32> to vector<1x16xf32>
    %41 = vector.shape_cast %38 : vector<1x16xf32> to vector<1x1x16xf32>
    tpu.vector_store %arg6[%c0_34, %c10, %c3_35], %41 {strides = array<i32>} : memref<2x22x22xf32, #tpu.memory_space<vmem>>, vector<1x1x16xf32>,
    %c0_36 = arith.constant 0 : index
    %c128 = arith.constant 128 : index
    %42 = vector.load %arg4[%c0_36, %c128] : memref<1x256xf32, #tpu.memory_space<vmem>>, vector<1x16xf32>
    %c0_37 = arith.constant 0 : index
    %c11 = arith.constant 11 : index
    %c3_38 = arith.constant 3 : index
    %43 = vector.load %arg6[%c0_37, %c11, %c3_38] : memref<2x22x22xf32, #tpu.memory_space<vmem>>, vector<1x1x16xf32>
    %44 = vector.shape_cast %43 : vector<1x1x16xf32> to vector<1x16xf32>
    %45 = vector.shape_cast %42 : vector<1x16xf32> to vector<1x1x16xf32>
    tpu.vector_store %arg6[%c0_37, %c11, %c3_38], %45 {strides = array<i32>} : memref<2x22x22xf32, #tpu.memory_space<vmem>>, vector<1x1x16xf32>,
    %c0_39 = arith.constant 0 : index
    %c144 = arith.constant 144 : index
    %46 = vector.load %arg4[%c0_39, %c144] : memref<1x256xf32, #tpu.memory_space<vmem>>, vector<1x16xf32>
    %c0_40 = arith.constant 0 : index
    %c12 = arith.constant 12 : index
    %c3_41 = arith.constant 3 : index
    %47 = vector.load %arg6[%c0_40, %c12, %c3_41] : memref<2x22x22xf32, #tpu.memory_space<vmem>>, vector<1x1x16xf32>
    %48 = vector.shape_cast %47 : vector<1x1x16xf32> to vector<1x16xf32>
    %49 = vector.shape_cast %46 : vector<1x16xf32> to vector<1x1x16xf32>
    tpu.vector_store %arg6[%c0_40, %c12, %c3_41], %49 {strides = array<i32>} : memref<2x22x22xf32, #tpu.memory_space<vmem>>, vector<1x1x16xf32>,
    %c0_42 = arith.constant 0 : index
    %c160 = arith.constant 160 : index
    %50 = vector.load %arg4[%c0_42, %c160] : memref<1x256xf32, #tpu.memory_space<vmem>>, vector<1x16xf32>
    %c0_43 = arith.constant 0 : index
    %c13 = arith.constant 13 : index
    %c3_44 = arith.constant 3 : index
    %51 = vector.load %arg6[%c0_43, %c13, %c3_44] : memref<2x22x22xf32, #tpu.memory_space<vmem>>, vector<1x1x16xf32>
    %52 = vector.shape_cast %51 : vector<1x1x16xf32> to vector<1x16xf32>
    %53 = vector.shape_cast %50 : vector<1x16xf32> to vector<1x1x16xf32>
    tpu.vector_store %arg6[%c0_43, %c13, %c3_44], %53 {strides = array<i32>} : memref<2x22x22xf32, #tpu.memory_space<vmem>>, vector<1x1x16xf32>,
    %c0_45 = arith.constant 0 : index
    %c176 = arith.constant 176 : index
    %54 = vector.load %arg4[%c0_45, %c176] : memref<1x256xf32, #tpu.memory_space<vmem>>, vector<1x16xf32>
    %c0_46 = arith.constant 0 : index
    %c14 = arith.constant 14 : index
    %c3_47 = arith.constant 3 : index
    %55 = vector.load %arg6[%c0_46, %c14, %c3_47] : memref<2x22x22xf32, #tpu.memory_space<vmem>>, vector<1x1x16xf32>
    %56 = vector.shape_cast %55 : vector<1x1x16xf32> to vector<1x16xf32>
    %57 = vector.shape_cast %54 : vector<1x16xf32> to vector<1x1x16xf32>
    tpu.vector_store %arg6[%c0_46, %c14, %c3_47], %57 {strides = array<i32>} : memref<2x22x22xf32, #tpu.memory_space<vmem>>, vector<1x1x16xf32>,
    %c0_48 = arith.constant 0 : index
    %c192 = arith.constant 192 : index
    %58 = vector.load %arg4[%c0_48, %c192] : memref<1x256xf32, #tpu.memory_space<vmem>>, vector<1x16xf32>
    %c0_49 = arith.constant 0 : index
    %c15 = arith.constant 15 : index
    %c3_50 = arith.constant 3 : index
    %59 = vector.load %arg6[%c0_49, %c15, %c3_50] : memref<2x22x22xf32, #tpu.memory_space<vmem>>, vector<1x1x16xf32>
    %60 = vector.shape_cast %59 : vector<1x1x16xf32> to vector<1x16xf32>
    %61 = vector.shape_cast %58 : vector<1x16xf32> to vector<1x1x16xf32>
    tpu.vector_store %arg6[%c0_49, %c15, %c3_50], %61 {strides = array<i32>} : memref<2x22x22xf32, #tpu.memory_space<vmem>>, vector<1x1x16xf32>,
    %c0_51 = arith.constant 0 : index
    %c208 = arith.constant 208 : index
    %62 = vector.load %arg4[%c0_51, %c208] : memref<1x256xf32, #tpu.memory_space<vmem>>, vector<1x16xf32>
    %c0_52 = arith.constant 0 : index
    %c16_53 = arith.constant 16 : index
    %c3_54 = arith.constant 3 : index
    %63 = vector.load %arg6[%c0_52, %c16_53, %c3_54] : memref<2x22x22xf32, #tpu.memory_space<vmem>>, vector<1x1x16xf32>
    %64 = vector.shape_cast %63 : vector<1x1x16xf32> to vector<1x16xf32>
    %65 = vector.shape_cast %62 : vector<1x16xf32> to vector<1x1x16xf32>
    tpu.vector_store %arg6[%c0_52, %c16_53, %c3_54], %65 {strides = array<i32>} : memref<2x22x22xf32, #tpu.memory_space<vmem>>, vector<1x1x16xf32>,
    %c0_55 = arith.constant 0 : index
    %c224 = arith.constant 224 : index
    %66 = vector.load %arg4[%c0_55, %c224] : memref<1x256xf32, #tpu.memory_space<vmem>>, vector<1x16xf32>
    %c0_56 = arith.constant 0 : index
    %c17 = arith.constant 17 : index
    %c3_57 = arith.constant 3 : index
    %67 = vector.load %arg6[%c0_56, %c17, %c3_57] : memref<2x22x22xf32, #tpu.memory_space<vmem>>, vector<1x1x16xf32>
    %68 = vector.shape_cast %67 : vector<1x1x16xf32> to vector<1x16xf32>
    %69 = vector.shape_cast %66 : vector<1x16xf32> to vector<1x1x16xf32>
    tpu.vector_store %arg6[%c0_56, %c17, %c3_57], %69 {strides = array<i32>} : memref<2x22x22xf32, #tpu.memory_space<vmem>>, vector<1x1x16xf32>,
    %c0_58 = arith.constant 0 : index
    %c240 = arith.constant 240 : index
    %70 = vector.load %arg4[%c0_58, %c240] : memref<1x256xf32, #tpu.memory_space<vmem>>, vector<1x16xf32>
    %c0_59 = arith.constant 0 : index
    %c18 = arith.constant 18 : index
    %c3_60 = arith.constant 3 : index
    %71 = vector.load %arg6[%c0_59, %c18, %c3_60] : memref<2x22x22xf32, #tpu.memory_space<vmem>>, vector<1x1x16xf32>
    %72 = vector.shape_cast %71 : vector<1x1x16xf32> to vector<1x16xf32>
    %73 = vector.shape_cast %70 : vector<1x16xf32> to vector<1x1x16xf32>
    tpu.vector_store %arg6[%c0_59, %c18, %c3_60], %73 {strides = array<i32>} : memref<2x22x22xf32, #tpu.memory_space<vmem>>, vector<1x1x16xf32>,
    %c0_61 = arith.constant 0 : index
    %c0_62 = arith.constant 0 : index
    %74 = vector.load %arg5[%c0_61, %c0_62] : memref<1x256xf32, #tpu.memory_space<vmem>>, vector<1x16xf32>
    %c1 = arith.constant 1 : index
    %c3_63 = arith.constant 3 : index
    %c3_64 = arith.constant 3 : index
    %75 = vector.load %arg6[%c1, %c3_63, %c3_64] : memref<2x22x22xf32, #tpu.memory_space<vmem>>, vector<1x1x16xf32>
    %76 = vector.shape_cast %75 : vector<1x1x16xf32> to vector<1x16xf32>
    %77 = vector.shape_cast %74 : vector<1x16xf32> to vector<1x1x16xf32>
    tpu.vector_store %arg6[%c1, %c3_63, %c3_64], %77 {strides = array<i32>} : memref<2x22x22xf32, #tpu.memory_space<vmem>>, vector<1x1x16xf32>,
    %c0_65 = arith.constant 0 : index
    %c16_66 = arith.constant 16 : index
    %78 = vector.load %arg5[%c0_65, %c16_66] : memref<1x256xf32, #tpu.memory_space<vmem>>, vector<1x16xf32>
    %c1_67 = arith.constant 1 : index
    %c4_68 = arith.constant 4 : index
    %c3_69 = arith.constant 3 : index
    %79 = vector.load %arg6[%c1_67, %c4_68, %c3_69] : memref<2x22x22xf32, #tpu.memory_space<vmem>>, vector<1x1x16xf32>
    %80 = vector.shape_cast %79 : vector<1x1x16xf32> to vector<1x16xf32>
    %81 = vector.shape_cast %78 : vector<1x16xf32> to vector<1x1x16xf32>
    tpu.vector_store %arg6[%c1_67, %c4_68, %c3_69], %81 {strides = array<i32>} : memref<2x22x22xf32, #tpu.memory_space<vmem>>, vector<1x1x16xf32>,
    %c0_70 = arith.constant 0 : index
    %c32_71 = arith.constant 32 : index
    %82 = vector.load %arg5[%c0_70, %c32_71] : memref<1x256xf32, #tpu.memory_space<vmem>>, vector<1x16xf32>
    %c1_72 = arith.constant 1 : index
    %c5_73 = arith.constant 5 : index
    %c3_74 = arith.constant 3 : index
    %83 = vector.load %arg6[%c1_72, %c5_73, %c3_74] : memref<2x22x22xf32, #tpu.memory_space<vmem>>, vector<1x1x16xf32>
    %84 = vector.shape_cast %83 : vector<1x1x16xf32> to vector<1x16xf32>
    %85 = vector.shape_cast %82 : vector<1x16xf32> to vector<1x1x16xf32>
    tpu.vector_store %arg6[%c1_72, %c5_73, %c3_74], %85 {strides = array<i32>} : memref<2x22x22xf32, #tpu.memory_space<vmem>>, vector<1x1x16xf32>,
    %c0_75 = arith.constant 0 : index
    %c48_76 = arith.constant 48 : index
    %86 = vector.load %arg5[%c0_75, %c48_76] : memref<1x256xf32, #tpu.memory_space<vmem>>, vector<1x16xf32>
    %c1_77 = arith.constant 1 : index
    %c6_78 = arith.constant 6 : index
    %c3_79 = arith.constant 3 : index
    %87 = vector.load %arg6[%c1_77, %c6_78, %c3_79] : memref<2x22x22xf32, #tpu.memory_space<vmem>>, vector<1x1x16xf32>
    %88 = vector.shape_cast %87 : vector<1x1x16xf32> to vector<1x16xf32>
    %89 = vector.shape_cast %86 : vector<1x16xf32> to vector<1x1x16xf32>
    tpu.vector_store %arg6[%c1_77, %c6_78, %c3_79], %89 {strides = array<i32>} : memref<2x22x22xf32, #tpu.memory_space<vmem>>, vector<1x1x16xf32>,
    %c0_80 = arith.constant 0 : index
    %c64_81 = arith.constant 64 : index
    %90 = vector.load %arg5[%c0_80, %c64_81] : memref<1x256xf32, #tpu.memory_space<vmem>>, vector<1x16xf32>
    %c1_82 = arith.constant 1 : index
    %c7_83 = arith.constant 7 : index
    %c3_84 = arith.constant 3 : index
    %91 = vector.load %arg6[%c1_82, %c7_83, %c3_84] : memref<2x22x22xf32, #tpu.memory_space<vmem>>, vector<1x1x16xf32>
    %92 = vector.shape_cast %91 : vector<1x1x16xf32> to vector<1x16xf32>
    %93 = vector.shape_cast %90 : vector<1x16xf32> to vector<1x1x16xf32>
    tpu.vector_store %arg6[%c1_82, %c7_83, %c3_84], %93 {strides = array<i32>} : memref<2x22x22xf32, #tpu.memory_space<vmem>>, vector<1x1x16xf32>,
    %c0_85 = arith.constant 0 : index
    %c80_86 = arith.constant 80 : index
    %94 = vector.load %arg5[%c0_85, %c80_86] : memref<1x256xf32, #tpu.memory_space<vmem>>, vector<1x16xf32>
    %c1_87 = arith.constant 1 : index
    %c8_88 = arith.constant 8 : index
    %c3_89 = arith.constant 3 : index
    %95 = vector.load %arg6[%c1_87, %c8_88, %c3_89] : memref<2x22x22xf32, #tpu.memory_space<vmem>>, vector<1x1x16xf32>
    %96 = vector.shape_cast %95 : vector<1x1x16xf32> to vector<1x16xf32>
    %97 = vector.shape_cast %94 : vector<1x16xf32> to vector<1x1x16xf32>
    tpu.vector_store %arg6[%c1_87, %c8_88, %c3_89], %97 {strides = array<i32>} : memref<2x22x22xf32, #tpu.memory_space<vmem>>, vector<1x1x16xf32>,
    %c0_90 = arith.constant 0 : index
    %c96_91 = arith.constant 96 : index
    %98 = vector.load %arg5[%c0_90, %c96_91] : memref<1x256xf32, #tpu.memory_space<vmem>>, vector<1x16xf32>
    %c1_92 = arith.constant 1 : index
    %c9_93 = arith.constant 9 : index
    %c3_94 = arith.constant 3 : index
    %99 = vector.load %arg6[%c1_92, %c9_93, %c3_94] : memref<2x22x22xf32, #tpu.memory_space<vmem>>, vector<1x1x16xf32>
    %100 = vector.shape_cast %99 : vector<1x1x16xf32> to vector<1x16xf32>
    %101 = vector.shape_cast %98 : vector<1x16xf32> to vector<1x1x16xf32>
    tpu.vector_store %arg6[%c1_92, %c9_93, %c3_94], %101 {strides = array<i32>} : memref<2x22x22xf32, #tpu.memory_space<vmem>>, vector<1x1x16xf32>,
    %c0_95 = arith.constant 0 : index
    %c112_96 = arith.constant 112 : index
    %102 = vector.load %arg5[%c0_95, %c112_96] : memref<1x256xf32, #tpu.memory_space<vmem>>, vector<1x16xf32>
    %c1_97 = arith.constant 1 : index
    %c10_98 = arith.constant 10 : index
    %c3_99 = arith.constant 3 : index
    %103 = vector.load %arg6[%c1_97, %c10_98, %c3_99] : memref<2x22x22xf32, #tpu.memory_space<vmem>>, vector<1x1x16xf32>
    %104 = vector.shape_cast %103 : vector<1x1x16xf32> to vector<1x16xf32>
    %105 = vector.shape_cast %102 : vector<1x16xf32> to vector<1x1x16xf32>
    tpu.vector_store %arg6[%c1_97, %c10_98, %c3_99], %105 {strides = array<i32>} : memref<2x22x22xf32, #tpu.memory_space<vmem>>, vector<1x1x16xf32>,
    %c0_100 = arith.constant 0 : index
    %c128_101 = arith.constant 128 : index
    %106 = vector.load %arg5[%c0_100, %c128_101] : memref<1x256xf32, #tpu.memory_space<vmem>>, vector<1x16xf32>
    %c1_102 = arith.constant 1 : index
    %c11_103 = arith.constant 11 : index
    %c3_104 = arith.constant 3 : index
    %107 = vector.load %arg6[%c1_102, %c11_103, %c3_104] : memref<2x22x22xf32, #tpu.memory_space<vmem>>, vector<1x1x16xf32>
    %108 = vector.shape_cast %107 : vector<1x1x16xf32> to vector<1x16xf32>
    %109 = vector.shape_cast %106 : vector<1x16xf32> to vector<1x1x16xf32>
    tpu.vector_store %arg6[%c1_102, %c11_103, %c3_104], %109 {strides = array<i32>} : memref<2x22x22xf32, #tpu.memory_space<vmem>>, vector<1x1x16xf32>,
    %c0_105 = arith.constant 0 : index
    %c144_106 = arith.constant 144 : index
    %110 = vector.load %arg5[%c0_105, %c144_106] : memref<1x256xf32, #tpu.memory_space<vmem>>, vector<1x16xf32>
    %c1_107 = arith.constant 1 : index
    %c12_108 = arith.constant 12 : index
    %c3_109 = arith.constant 3 : index
    %111 = vector.load %arg6[%c1_107, %c12_108, %c3_109] : memref<2x22x22xf32, #tpu.memory_space<vmem>>, vector<1x1x16xf32>
    %112 = vector.shape_cast %111 : vector<1x1x16xf32> to vector<1x16xf32>
    %113 = vector.shape_cast %110 : vector<1x16xf32> to vector<1x1x16xf32>
    tpu.vector_store %arg6[%c1_107, %c12_108, %c3_109], %113 {strides = array<i32>} : memref<2x22x22xf32, #tpu.memory_space<vmem>>, vector<1x1x16xf32>,
    %c0_110 = arith.constant 0 : index
    %c160_111 = arith.constant 160 : index
    %114 = vector.load %arg5[%c0_110, %c160_111] : memref<1x256xf32, #tpu.memory_space<vmem>>, vector<1x16xf32>
    %c1_112 = arith.constant 1 : index
    %c13_113 = arith.constant 13 : index
    %c3_114 = arith.constant 3 : index
    %115 = vector.load %arg6[%c1_112, %c13_113, %c3_114] : memref<2x22x22xf32, #tpu.memory_space<vmem>>, vector<1x1x16xf32>
    %116 = vector.shape_cast %115 : vector<1x1x16xf32> to vector<1x16xf32>
    %117 = vector.shape_cast %114 : vector<1x16xf32> to vector<1x1x16xf32>
    tpu.vector_store %arg6[%c1_112, %c13_113, %c3_114], %117 {strides = array<i32>} : memref<2x22x22xf32, #tpu.memory_space<vmem>>, vector<1x1x16xf32>,
    %c0_115 = arith.constant 0 : index
    %c176_116 = arith.constant 176 : index
    %118 = vector.load %arg5[%c0_115, %c176_116] : memref<1x256xf32, #tpu.memory_space<vmem>>, vector<1x16xf32>
    %c1_117 = arith.constant 1 : index
    %c14_118 = arith.constant 14 : index
    %c3_119 = arith.constant 3 : index
    %119 = vector.load %arg6[%c1_117, %c14_118, %c3_119] : memref<2x22x22xf32, #tpu.memory_space<vmem>>, vector<1x1x16xf32>
    %120 = vector.shape_cast %119 : vector<1x1x16xf32> to vector<1x16xf32>
    %121 = vector.shape_cast %118 : vector<1x16xf32> to vector<1x1x16xf32>
    tpu.vector_store %arg6[%c1_117, %c14_118, %c3_119], %121 {strides = array<i32>} : memref<2x22x22xf32, #tpu.memory_space<vmem>>, vector<1x1x16xf32>,
    %c0_120 = arith.constant 0 : index
    %c192_121 = arith.constant 192 : index
    %122 = vector.load %arg5[%c0_120, %c192_121] : memref<1x256xf32, #tpu.memory_space<vmem>>, vector<1x16xf32>
    %c1_122 = arith.constant 1 : index
    %c15_123 = arith.constant 15 : index
    %c3_124 = arith.constant 3 : index
    %123 = vector.load %arg6[%c1_122, %c15_123, %c3_124] : memref<2x22x22xf32, #tpu.memory_space<vmem>>, vector<1x1x16xf32>
    %124 = vector.shape_cast %123 : vector<1x1x16xf32> to vector<1x16xf32>
    %125 = vector.shape_cast %122 : vector<1x16xf32> to vector<1x1x16xf32>
    tpu.vector_store %arg6[%c1_122, %c15_123, %c3_124], %125 {strides = array<i32>} : memref<2x22x22xf32, #tpu.memory_space<vmem>>, vector<1x1x16xf32>,
    %c0_125 = arith.constant 0 : index
    %c208_126 = arith.constant 208 : index
    %126 = vector.load %arg5[%c0_125, %c208_126] : memref<1x256xf32, #tpu.memory_space<vmem>>, vector<1x16xf32>
    %c1_127 = arith.constant 1 : index
    %c16_128 = arith.constant 16 : index
    %c3_129 = arith.constant 3 : index
    %127 = vector.load %arg6[%c1_127, %c16_128, %c3_129] : memref<2x22x22xf32, #tpu.memory_space<vmem>>, vector<1x1x16xf32>
    %128 = vector.shape_cast %127 : vector<1x1x16xf32> to vector<1x16xf32>
    %129 = vector.shape_cast %126 : vector<1x16xf32> to vector<1x1x16xf32>
    tpu.vector_store %arg6[%c1_127, %c16_128, %c3_129], %129 {strides = array<i32>} : memref<2x22x22xf32, #tpu.memory_space<vmem>>, vector<1x1x16xf32>,
    %c0_130 = arith.constant 0 : index
    %c224_131 = arith.constant 224 : index
    %130 = vector.load %arg5[%c0_130, %c224_131] : memref<1x256xf32, #tpu.memory_space<vmem>>, vector<1x16xf32>
    %c1_132 = arith.constant 1 : index
    %c17_133 = arith.constant 17 : index
    %c3_134 = arith.constant 3 : index
    %131 = vector.load %arg6[%c1_132, %c17_133, %c3_134] : memref<2x22x22xf32, #tpu.memory_space<vmem>>, vector<1x1x16xf32>
    %132 = vector.shape_cast %131 : vector<1x1x16xf32> to vector<1x16xf32>
    %133 = vector.shape_cast %130 : vector<1x16xf32> to vector<1x1x16xf32>
    tpu.vector_store %arg6[%c1_132, %c17_133, %c3_134], %133 {strides = array<i32>} : memref<2x22x22xf32, #tpu.memory_space<vmem>>, vector<1x1x16xf32>,
    %c0_135 = arith.constant 0 : index
    %c240_136 = arith.constant 240 : index
    %134 = vector.load %arg5[%c0_135, %c240_136] : memref<1x256xf32, #tpu.memory_space<vmem>>, vector<1x16xf32>
    %c1_137 = arith.constant 1 : index
    %c18_138 = arith.constant 18 : index
    %c3_139 = arith.constant 3 : index
    %135 = vector.load %arg6[%c1_137, %c18_138, %c3_139] : memref<2x22x22xf32, #tpu.memory_space<vmem>>, vector<1x1x16xf32>
    %136 = vector.shape_cast %135 : vector<1x1x16xf32> to vector<1x16xf32>
    %137 = vector.shape_cast %134 : vector<1x16xf32> to vector<1x1x16xf32>
    tpu.vector_store %arg6[%c1_137, %c18_138, %c3_139], %137 {strides = array<i32>} : memref<2x22x22xf32, #tpu.memory_space<vmem>>, vector<1x1x16xf32>,
    %cst_140 = arith.constant 0.000000e+00 : f32
    %138 = vector.broadcast %cst_140 : f32 to vector<16x16xf32>
    %c0_141 = arith.constant 0 : index
    %c0_142 = arith.constant 0 : index
    %c0_143 = arith.constant 0 : index
    %139 = vector.load %arg6[%c0_141, %c0_142, %c0_143] : memref<2x22x22xf32, #tpu.memory_space<vmem>>, vector<1x16x22xf32>
    %140 = vector.shape_cast %139 : vector<1x16x22xf32> to vector<16x22xf32>
    %c0_144 = arith.constant 0 : index
    %141 = memref.load %arg1[%c0_144] : memref<98xf32, #tpu.memory_space<smem>>
    %142 = vector.extract_strided_slice %140 {offsets = [0, 0], sizes = [16, 16], strides = [1, 1]} : vector<16x22xf32> to vector<16x16xf32>
    %143 = vector.broadcast %141 : f32 to vector<16x16xf32>
    %144 = arith.mulf %143, %142 : vector<16x16xf32>
    %145 = arith.addf %138, %144 : vector<16x16xf32>
    %c1_145 = arith.constant 1 : index
    %146 = memref.load %arg1[%c1_145] : memref<98xf32, #tpu.memory_space<smem>>
    %147 = vector.extract_strided_slice %140 {offsets = [0, 1], sizes = [16, 16], strides = [1, 1]} : vector<16x22xf32> to vector<16x16xf32>
    %148 = vector.broadcast %146 : f32 to vector<16x16xf32>
    %149 = arith.mulf %148, %147 : vector<16x16xf32>
    %150 = arith.addf %145, %149 : vector<16x16xf32>
    %c2 = arith.constant 2 : index
    %151 = memref.load %arg1[%c2] : memref<98xf32, #tpu.memory_space<smem>>
    %152 = vector.extract_strided_slice %140 {offsets = [0, 2], sizes = [16, 16], strides = [1, 1]} : vector<16x22xf32> to vector<16x16xf32>
    %153 = vector.broadcast %151 : f32 to vector<16x16xf32>
    %154 = arith.mulf %153, %152 : vector<16x16xf32>
    %155 = arith.addf %150, %154 : vector<16x16xf32>
    %c3_146 = arith.constant 3 : index
    %156 = memref.load %arg1[%c3_146] : memref<98xf32, #tpu.memory_space<smem>>
    %157 = vector.extract_strided_slice %140 {offsets = [0, 3], sizes = [16, 16], strides = [1, 1]} : vector<16x22xf32> to vector<16x16xf32>
    %158 = vector.broadcast %156 : f32 to vector<16x16xf32>
    %159 = arith.mulf %158, %157 : vector<16x16xf32>
    %160 = arith.addf %155, %159 : vector<16x16xf32>
    %c4_147 = arith.constant 4 : index
    %161 = memref.load %arg1[%c4_147] : memref<98xf32, #tpu.memory_space<smem>>
    %162 = vector.extract_strided_slice %140 {offsets = [0, 4], sizes = [16, 16], strides = [1, 1]} : vector<16x22xf32> to vector<16x16xf32>
    %163 = vector.broadcast %161 : f32 to vector<16x16xf32>
    %164 = arith.mulf %163, %162 : vector<16x16xf32>
    %165 = arith.addf %160, %164 : vector<16x16xf32>
    %c5_148 = arith.constant 5 : index
    %166 = memref.load %arg1[%c5_148] : memref<98xf32, #tpu.memory_space<smem>>
    %167 = vector.extract_strided_slice %140 {offsets = [0, 5], sizes = [16, 16], strides = [1, 1]} : vector<16x22xf32> to vector<16x16xf32>
    %168 = vector.broadcast %166 : f32 to vector<16x16xf32>
    %169 = arith.mulf %168, %167 : vector<16x16xf32>
    %170 = arith.addf %165, %169 : vector<16x16xf32>
    %c6_149 = arith.constant 6 : index
    %171 = memref.load %arg1[%c6_149] : memref<98xf32, #tpu.memory_space<smem>>
    %172 = vector.extract_strided_slice %140 {offsets = [0, 6], sizes = [16, 16], strides = [1, 1]} : vector<16x22xf32> to vector<16x16xf32>
    %173 = vector.broadcast %171 : f32 to vector<16x16xf32>
    %174 = arith.mulf %173, %172 : vector<16x16xf32>
    %175 = arith.addf %170, %174 : vector<16x16xf32>
    %c0_150 = arith.constant 0 : index
    %c1_151 = arith.constant 1 : index
    %c0_152 = arith.constant 0 : index
    %176 = vector.load %arg6[%c0_150, %c1_151, %c0_152] : memref<2x22x22xf32, #tpu.memory_space<vmem>>, vector<1x16x22xf32>
    %177 = vector.shape_cast %176 : vector<1x16x22xf32> to vector<16x22xf32>
    %c7_153 = arith.constant 7 : index
    %178 = memref.load %arg1[%c7_153] : memref<98xf32, #tpu.memory_space<smem>>
    %179 = vector.extract_strided_slice %177 {offsets = [0, 0], sizes = [16, 16], strides = [1, 1]} : vector<16x22xf32> to vector<16x16xf32>
    %180 = vector.broadcast %178 : f32 to vector<16x16xf32>
    %181 = arith.mulf %180, %179 : vector<16x16xf32>
    %182 = arith.addf %175, %181 : vector<16x16xf32>
    %c8_154 = arith.constant 8 : index
    %183 = memref.load %arg1[%c8_154] : memref<98xf32, #tpu.memory_space<smem>>
    %184 = vector.extract_strided_slice %177 {offsets = [0, 1], sizes = [16, 16], strides = [1, 1]} : vector<16x22xf32> to vector<16x16xf32>
    %185 = vector.broadcast %183 : f32 to vector<16x16xf32>
    %186 = arith.mulf %185, %184 : vector<16x16xf32>
    %187 = arith.addf %182, %186 : vector<16x16xf32>
    %c9_155 = arith.constant 9 : index
    %188 = memref.load %arg1[%c9_155] : memref<98xf32, #tpu.memory_space<smem>>
    %189 = vector.extract_strided_slice %177 {offsets = [0, 2], sizes = [16, 16], strides = [1, 1]} : vector<16x22xf32> to vector<16x16xf32>
    %190 = vector.broadcast %188 : f32 to vector<16x16xf32>
    %191 = arith.mulf %190, %189 : vector<16x16xf32>
    %192 = arith.addf %187, %191 : vector<16x16xf32>
    %c10_156 = arith.constant 10 : index
    %193 = memref.load %arg1[%c10_156] : memref<98xf32, #tpu.memory_space<smem>>
    %194 = vector.extract_strided_slice %177 {offsets = [0, 3], sizes = [16, 16], strides = [1, 1]} : vector<16x22xf32> to vector<16x16xf32>
    %195 = vector.broadcast %193 : f32 to vector<16x16xf32>
    %196 = arith.mulf %195, %194 : vector<16x16xf32>
    %197 = arith.addf %192, %196 : vector<16x16xf32>
    %c11_157 = arith.constant 11 : index
    %198 = memref.load %arg1[%c11_157] : memref<98xf32, #tpu.memory_space<smem>>
    %199 = vector.extract_strided_slice %177 {offsets = [0, 4], sizes = [16, 16], strides = [1, 1]} : vector<16x22xf32> to vector<16x16xf32>
    %200 = vector.broadcast %198 : f32 to vector<16x16xf32>
    %201 = arith.mulf %200, %199 : vector<16x16xf32>
    %202 = arith.addf %197, %201 : vector<16x16xf32>
    %c12_158 = arith.constant 12 : index
    %203 = memref.load %arg1[%c12_158] : memref<98xf32, #tpu.memory_space<smem>>
    %204 = vector.extract_strided_slice %177 {offsets = [0, 5], sizes = [16, 16], strides = [1, 1]} : vector<16x22xf32> to vector<16x16xf32>
    %205 = vector.broadcast %203 : f32 to vector<16x16xf32>
    %206 = arith.mulf %205, %204 : vector<16x16xf32>
    %207 = arith.addf %202, %206 : vector<16x16xf32>
    %c13_159 = arith.constant 13 : index
    %208 = memref.load %arg1[%c13_159] : memref<98xf32, #tpu.memory_space<smem>>
    %209 = vector.extract_strided_slice %177 {offsets = [0, 6], sizes = [16, 16], strides = [1, 1]} : vector<16x22xf32> to vector<16x16xf32>
    %210 = vector.broadcast %208 : f32 to vector<16x16xf32>
    %211 = arith.mulf %210, %209 : vector<16x16xf32>
    %212 = arith.addf %207, %211 : vector<16x16xf32>
    %c0_160 = arith.constant 0 : index
    %c2_161 = arith.constant 2 : index
    %c0_162 = arith.constant 0 : index
    %213 = vector.load %arg6[%c0_160, %c2_161, %c0_162] : memref<2x22x22xf32, #tpu.memory_space<vmem>>, vector<1x16x22xf32>
    %214 = vector.shape_cast %213 : vector<1x16x22xf32> to vector<16x22xf32>
    %c14_163 = arith.constant 14 : index
    %215 = memref.load %arg1[%c14_163] : memref<98xf32, #tpu.memory_space<smem>>
    %216 = vector.extract_strided_slice %214 {offsets = [0, 0], sizes = [16, 16], strides = [1, 1]} : vector<16x22xf32> to vector<16x16xf32>
    %217 = vector.broadcast %215 : f32 to vector<16x16xf32>
    %218 = arith.mulf %217, %216 : vector<16x16xf32>
    %219 = arith.addf %212, %218 : vector<16x16xf32>
    %c15_164 = arith.constant 15 : index
    %220 = memref.load %arg1[%c15_164] : memref<98xf32, #tpu.memory_space<smem>>
    %221 = vector.extract_strided_slice %214 {offsets = [0, 1], sizes = [16, 16], strides = [1, 1]} : vector<16x22xf32> to vector<16x16xf32>
    %222 = vector.broadcast %220 : f32 to vector<16x16xf32>
    %223 = arith.mulf %222, %221 : vector<16x16xf32>
    %224 = arith.addf %219, %223 : vector<16x16xf32>
    %c16_165 = arith.constant 16 : index
    %225 = memref.load %arg1[%c16_165] : memref<98xf32, #tpu.memory_space<smem>>
    %226 = vector.extract_strided_slice %214 {offsets = [0, 2], sizes = [16, 16], strides = [1, 1]} : vector<16x22xf32> to vector<16x16xf32>
    %227 = vector.broadcast %225 : f32 to vector<16x16xf32>
    %228 = arith.mulf %227, %226 : vector<16x16xf32>
    %229 = arith.addf %224, %228 : vector<16x16xf32>
    %c17_166 = arith.constant 17 : index
    %230 = memref.load %arg1[%c17_166] : memref<98xf32, #tpu.memory_space<smem>>
    %231 = vector.extract_strided_slice %214 {offsets = [0, 3], sizes = [16, 16], strides = [1, 1]} : vector<16x22xf32> to vector<16x16xf32>
    %232 = vector.broadcast %230 : f32 to vector<16x16xf32>
    %233 = arith.mulf %232, %231 : vector<16x16xf32>
    %234 = arith.addf %229, %233 : vector<16x16xf32>
    %c18_167 = arith.constant 18 : index
    %235 = memref.load %arg1[%c18_167] : memref<98xf32, #tpu.memory_space<smem>>
    %236 = vector.extract_strided_slice %214 {offsets = [0, 4], sizes = [16, 16], strides = [1, 1]} : vector<16x22xf32> to vector<16x16xf32>
    %237 = vector.broadcast %235 : f32 to vector<16x16xf32>
    %238 = arith.mulf %237, %236 : vector<16x16xf32>
    %239 = arith.addf %234, %238 : vector<16x16xf32>
    %c19 = arith.constant 19 : index
    %240 = memref.load %arg1[%c19] : memref<98xf32, #tpu.memory_space<smem>>
    %241 = vector.extract_strided_slice %214 {offsets = [0, 5], sizes = [16, 16], strides = [1, 1]} : vector<16x22xf32> to vector<16x16xf32>
    %242 = vector.broadcast %240 : f32 to vector<16x16xf32>
    %243 = arith.mulf %242, %241 : vector<16x16xf32>
    %244 = arith.addf %239, %243 : vector<16x16xf32>
    %c20 = arith.constant 20 : index
    %245 = memref.load %arg1[%c20] : memref<98xf32, #tpu.memory_space<smem>>
    %246 = vector.extract_strided_slice %214 {offsets = [0, 6], sizes = [16, 16], strides = [1, 1]} : vector<16x22xf32> to vector<16x16xf32>
    %247 = vector.broadcast %245 : f32 to vector<16x16xf32>
    %248 = arith.mulf %247, %246 : vector<16x16xf32>
    %249 = arith.addf %244, %248 : vector<16x16xf32>
    %c0_168 = arith.constant 0 : index
    %c3_169 = arith.constant 3 : index
    %c0_170 = arith.constant 0 : index
    %250 = vector.load %arg6[%c0_168, %c3_169, %c0_170] : memref<2x22x22xf32, #tpu.memory_space<vmem>>, vector<1x16x22xf32>
    %251 = vector.shape_cast %250 : vector<1x16x22xf32> to vector<16x22xf32>
    %c21 = arith.constant 21 : index
    %252 = memref.load %arg1[%c21] : memref<98xf32, #tpu.memory_space<smem>>
    %253 = vector.extract_strided_slice %251 {offsets = [0, 0], sizes = [16, 16], strides = [1, 1]} : vector<16x22xf32> to vector<16x16xf32>
    %254 = vector.broadcast %252 : f32 to vector<16x16xf32>
    %255 = arith.mulf %254, %253 : vector<16x16xf32>
    %256 = arith.addf %249, %255 : vector<16x16xf32>
    %c22 = arith.constant 22 : index
    %257 = memref.load %arg1[%c22] : memref<98xf32, #tpu.memory_space<smem>>
    %258 = vector.extract_strided_slice %251 {offsets = [0, 1], sizes = [16, 16], strides = [1, 1]} : vector<16x22xf32> to vector<16x16xf32>
    %259 = vector.broadcast %257 : f32 to vector<16x16xf32>
    %260 = arith.mulf %259, %258 : vector<16x16xf32>
    %261 = arith.addf %256, %260 : vector<16x16xf32>
    %c23 = arith.constant 23 : index
    %262 = memref.load %arg1[%c23] : memref<98xf32, #tpu.memory_space<smem>>
    %263 = vector.extract_strided_slice %251 {offsets = [0, 2], sizes = [16, 16], strides = [1, 1]} : vector<16x22xf32> to vector<16x16xf32>
    %264 = vector.broadcast %262 : f32 to vector<16x16xf32>
    %265 = arith.mulf %264, %263 : vector<16x16xf32>
    %266 = arith.addf %261, %265 : vector<16x16xf32>
    %c24 = arith.constant 24 : index
    %267 = memref.load %arg1[%c24] : memref<98xf32, #tpu.memory_space<smem>>
    %268 = vector.extract_strided_slice %251 {offsets = [0, 3], sizes = [16, 16], strides = [1, 1]} : vector<16x22xf32> to vector<16x16xf32>
    %269 = vector.broadcast %267 : f32 to vector<16x16xf32>
    %270 = arith.mulf %269, %268 : vector<16x16xf32>
    %271 = arith.addf %266, %270 : vector<16x16xf32>
    %c25 = arith.constant 25 : index
    %272 = memref.load %arg1[%c25] : memref<98xf32, #tpu.memory_space<smem>>
    %273 = vector.extract_strided_slice %251 {offsets = [0, 4], sizes = [16, 16], strides = [1, 1]} : vector<16x22xf32> to vector<16x16xf32>
    %274 = vector.broadcast %272 : f32 to vector<16x16xf32>
    %275 = arith.mulf %274, %273 : vector<16x16xf32>
    %276 = arith.addf %271, %275 : vector<16x16xf32>
    %c26 = arith.constant 26 : index
    %277 = memref.load %arg1[%c26] : memref<98xf32, #tpu.memory_space<smem>>
    %278 = vector.extract_strided_slice %251 {offsets = [0, 5], sizes = [16, 16], strides = [1, 1]} : vector<16x22xf32> to vector<16x16xf32>
    %279 = vector.broadcast %277 : f32 to vector<16x16xf32>
    %280 = arith.mulf %279, %278 : vector<16x16xf32>
    %281 = arith.addf %276, %280 : vector<16x16xf32>
    %c27 = arith.constant 27 : index
    %282 = memref.load %arg1[%c27] : memref<98xf32, #tpu.memory_space<smem>>
    %283 = vector.extract_strided_slice %251 {offsets = [0, 6], sizes = [16, 16], strides = [1, 1]} : vector<16x22xf32> to vector<16x16xf32>
    %284 = vector.broadcast %282 : f32 to vector<16x16xf32>
    %285 = arith.mulf %284, %283 : vector<16x16xf32>
    %286 = arith.addf %281, %285 : vector<16x16xf32>
    %c0_171 = arith.constant 0 : index
    %c4_172 = arith.constant 4 : index
    %c0_173 = arith.constant 0 : index
    %287 = vector.load %arg6[%c0_171, %c4_172, %c0_173] : memref<2x22x22xf32, #tpu.memory_space<vmem>>, vector<1x16x22xf32>
    %288 = vector.shape_cast %287 : vector<1x16x22xf32> to vector<16x22xf32>
    %c28 = arith.constant 28 : index
    %289 = memref.load %arg1[%c28] : memref<98xf32, #tpu.memory_space<smem>>
    %290 = vector.extract_strided_slice %288 {offsets = [0, 0], sizes = [16, 16], strides = [1, 1]} : vector<16x22xf32> to vector<16x16xf32>
    %291 = vector.broadcast %289 : f32 to vector<16x16xf32>
    %292 = arith.mulf %291, %290 : vector<16x16xf32>
    %293 = arith.addf %286, %292 : vector<16x16xf32>
    %c29 = arith.constant 29 : index
    %294 = memref.load %arg1[%c29] : memref<98xf32, #tpu.memory_space<smem>>
    %295 = vector.extract_strided_slice %288 {offsets = [0, 1], sizes = [16, 16], strides = [1, 1]} : vector<16x22xf32> to vector<16x16xf32>
    %296 = vector.broadcast %294 : f32 to vector<16x16xf32>
    %297 = arith.mulf %296, %295 : vector<16x16xf32>
    %298 = arith.addf %293, %297 : vector<16x16xf32>
    %c30 = arith.constant 30 : index
    %299 = memref.load %arg1[%c30] : memref<98xf32, #tpu.memory_space<smem>>
    %300 = vector.extract_strided_slice %288 {offsets = [0, 2], sizes = [16, 16], strides = [1, 1]} : vector<16x22xf32> to vector<16x16xf32>
    %301 = vector.broadcast %299 : f32 to vector<16x16xf32>
    %302 = arith.mulf %301, %300 : vector<16x16xf32>
    %303 = arith.addf %298, %302 : vector<16x16xf32>
    %c31 = arith.constant 31 : index
    %304 = memref.load %arg1[%c31] : memref<98xf32, #tpu.memory_space<smem>>
    %305 = vector.extract_strided_slice %288 {offsets = [0, 3], sizes = [16, 16], strides = [1, 1]} : vector<16x22xf32> to vector<16x16xf32>
    %306 = vector.broadcast %304 : f32 to vector<16x16xf32>
    %307 = arith.mulf %306, %305 : vector<16x16xf32>
    %308 = arith.addf %303, %307 : vector<16x16xf32>
    %c32_174 = arith.constant 32 : index
    %309 = memref.load %arg1[%c32_174] : memref<98xf32, #tpu.memory_space<smem>>
    %310 = vector.extract_strided_slice %288 {offsets = [0, 4], sizes = [16, 16], strides = [1, 1]} : vector<16x22xf32> to vector<16x16xf32>
    %311 = vector.broadcast %309 : f32 to vector<16x16xf32>
    %312 = arith.mulf %311, %310 : vector<16x16xf32>
    %313 = arith.addf %308, %312 : vector<16x16xf32>
    %c33 = arith.constant 33 : index
    %314 = memref.load %arg1[%c33] : memref<98xf32, #tpu.memory_space<smem>>
    %315 = vector.extract_strided_slice %288 {offsets = [0, 5], sizes = [16, 16], strides = [1, 1]} : vector<16x22xf32> to vector<16x16xf32>
    %316 = vector.broadcast %314 : f32 to vector<16x16xf32>
    %317 = arith.mulf %316, %315 : vector<16x16xf32>
    %318 = arith.addf %313, %317 : vector<16x16xf32>
    %c34 = arith.constant 34 : index
    %319 = memref.load %arg1[%c34] : memref<98xf32, #tpu.memory_space<smem>>
    %320 = vector.extract_strided_slice %288 {offsets = [0, 6], sizes = [16, 16], strides = [1, 1]} : vector<16x22xf32> to vector<16x16xf32>
    %321 = vector.broadcast %319 : f32 to vector<16x16xf32>
    %322 = arith.mulf %321, %320 : vector<16x16xf32>
    %323 = arith.addf %318, %322 : vector<16x16xf32>
    %c0_175 = arith.constant 0 : index
    %c5_176 = arith.constant 5 : index
    %c0_177 = arith.constant 0 : index
    %324 = vector.load %arg6[%c0_175, %c5_176, %c0_177] : memref<2x22x22xf32, #tpu.memory_space<vmem>>, vector<1x16x22xf32>
    %325 = vector.shape_cast %324 : vector<1x16x22xf32> to vector<16x22xf32>
    %c35 = arith.constant 35 : index
    %326 = memref.load %arg1[%c35] : memref<98xf32, #tpu.memory_space<smem>>
    %327 = vector.extract_strided_slice %325 {offsets = [0, 0], sizes = [16, 16], strides = [1, 1]} : vector<16x22xf32> to vector<16x16xf32>
    %328 = vector.broadcast %326 : f32 to vector<16x16xf32>
    %329 = arith.mulf %328, %327 : vector<16x16xf32>
    %330 = arith.addf %323, %329 : vector<16x16xf32>
    %c36 = arith.constant 36 : index
    %331 = memref.load %arg1[%c36] : memref<98xf32, #tpu.memory_space<smem>>
    %332 = vector.extract_strided_slice %325 {offsets = [0, 1], sizes = [16, 16], strides = [1, 1]} : vector<16x22xf32> to vector<16x16xf32>
    %333 = vector.broadcast %331 : f32 to vector<16x16xf32>
    %334 = arith.mulf %333, %332 : vector<16x16xf32>
    %335 = arith.addf %330, %334 : vector<16x16xf32>
    %c37 = arith.constant 37 : index
    %336 = memref.load %arg1[%c37] : memref<98xf32, #tpu.memory_space<smem>>
    %337 = vector.extract_strided_slice %325 {offsets = [0, 2], sizes = [16, 16], strides = [1, 1]} : vector<16x22xf32> to vector<16x16xf32>
    %338 = vector.broadcast %336 : f32 to vector<16x16xf32>
    %339 = arith.mulf %338, %337 : vector<16x16xf32>
    %340 = arith.addf %335, %339 : vector<16x16xf32>
    %c38 = arith.constant 38 : index
    %341 = memref.load %arg1[%c38] : memref<98xf32, #tpu.memory_space<smem>>
    %342 = vector.extract_strided_slice %325 {offsets = [0, 3], sizes = [16, 16], strides = [1, 1]} : vector<16x22xf32> to vector<16x16xf32>
    %343 = vector.broadcast %341 : f32 to vector<16x16xf32>
    %344 = arith.mulf %343, %342 : vector<16x16xf32>
    %345 = arith.addf %340, %344 : vector<16x16xf32>
    %c39 = arith.constant 39 : index
    %346 = memref.load %arg1[%c39] : memref<98xf32, #tpu.memory_space<smem>>
    %347 = vector.extract_strided_slice %325 {offsets = [0, 4], sizes = [16, 16], strides = [1, 1]} : vector<16x22xf32> to vector<16x16xf32>
    %348 = vector.broadcast %346 : f32 to vector<16x16xf32>
    %349 = arith.mulf %348, %347 : vector<16x16xf32>
    %350 = arith.addf %345, %349 : vector<16x16xf32>
    %c40 = arith.constant 40 : index
    %351 = memref.load %arg1[%c40] : memref<98xf32, #tpu.memory_space<smem>>
    %352 = vector.extract_strided_slice %325 {offsets = [0, 5], sizes = [16, 16], strides = [1, 1]} : vector<16x22xf32> to vector<16x16xf32>
    %353 = vector.broadcast %351 : f32 to vector<16x16xf32>
    %354 = arith.mulf %353, %352 : vector<16x16xf32>
    %355 = arith.addf %350, %354 : vector<16x16xf32>
    %c41 = arith.constant 41 : index
    %356 = memref.load %arg1[%c41] : memref<98xf32, #tpu.memory_space<smem>>
    %357 = vector.extract_strided_slice %325 {offsets = [0, 6], sizes = [16, 16], strides = [1, 1]} : vector<16x22xf32> to vector<16x16xf32>
    %358 = vector.broadcast %356 : f32 to vector<16x16xf32>
    %359 = arith.mulf %358, %357 : vector<16x16xf32>
    %360 = arith.addf %355, %359 : vector<16x16xf32>
    %c0_178 = arith.constant 0 : index
    %c6_179 = arith.constant 6 : index
    %c0_180 = arith.constant 0 : index
    %361 = vector.load %arg6[%c0_178, %c6_179, %c0_180] : memref<2x22x22xf32, #tpu.memory_space<vmem>>, vector<1x16x22xf32>
    %362 = vector.shape_cast %361 : vector<1x16x22xf32> to vector<16x22xf32>
    %c42 = arith.constant 42 : index
    %363 = memref.load %arg1[%c42] : memref<98xf32, #tpu.memory_space<smem>>
    %364 = vector.extract_strided_slice %362 {offsets = [0, 0], sizes = [16, 16], strides = [1, 1]} : vector<16x22xf32> to vector<16x16xf32>
    %365 = vector.broadcast %363 : f32 to vector<16x16xf32>
    %366 = arith.mulf %365, %364 : vector<16x16xf32>
    %367 = arith.addf %360, %366 : vector<16x16xf32>
    %c43 = arith.constant 43 : index
    %368 = memref.load %arg1[%c43] : memref<98xf32, #tpu.memory_space<smem>>
    %369 = vector.extract_strided_slice %362 {offsets = [0, 1], sizes = [16, 16], strides = [1, 1]} : vector<16x22xf32> to vector<16x16xf32>
    %370 = vector.broadcast %368 : f32 to vector<16x16xf32>
    %371 = arith.mulf %370, %369 : vector<16x16xf32>
    %372 = arith.addf %367, %371 : vector<16x16xf32>
    %c44 = arith.constant 44 : index
    %373 = memref.load %arg1[%c44] : memref<98xf32, #tpu.memory_space<smem>>
    %374 = vector.extract_strided_slice %362 {offsets = [0, 2], sizes = [16, 16], strides = [1, 1]} : vector<16x22xf32> to vector<16x16xf32>
    %375 = vector.broadcast %373 : f32 to vector<16x16xf32>
    %376 = arith.mulf %375, %374 : vector<16x16xf32>
    %377 = arith.addf %372, %376 : vector<16x16xf32>
    %c45 = arith.constant 45 : index
    %378 = memref.load %arg1[%c45] : memref<98xf32, #tpu.memory_space<smem>>
    %379 = vector.extract_strided_slice %362 {offsets = [0, 3], sizes = [16, 16], strides = [1, 1]} : vector<16x22xf32> to vector<16x16xf32>
    %380 = vector.broadcast %378 : f32 to vector<16x16xf32>
    %381 = arith.mulf %380, %379 : vector<16x16xf32>
    %382 = arith.addf %377, %381 : vector<16x16xf32>
    %c46 = arith.constant 46 : index
    %383 = memref.load %arg1[%c46] : memref<98xf32, #tpu.memory_space<smem>>
    %384 = vector.extract_strided_slice %362 {offsets = [0, 4], sizes = [16, 16], strides = [1, 1]} : vector<16x22xf32> to vector<16x16xf32>
    %385 = vector.broadcast %383 : f32 to vector<16x16xf32>
    %386 = arith.mulf %385, %384 : vector<16x16xf32>
    %387 = arith.addf %382, %386 : vector<16x16xf32>
    %c47 = arith.constant 47 : index
    %388 = memref.load %arg1[%c47] : memref<98xf32, #tpu.memory_space<smem>>
    %389 = vector.extract_strided_slice %362 {offsets = [0, 5], sizes = [16, 16], strides = [1, 1]} : vector<16x22xf32> to vector<16x16xf32>
    %390 = vector.broadcast %388 : f32 to vector<16x16xf32>
    %391 = arith.mulf %390, %389 : vector<16x16xf32>
    %392 = arith.addf %387, %391 : vector<16x16xf32>
    %c48_181 = arith.constant 48 : index
    %393 = memref.load %arg1[%c48_181] : memref<98xf32, #tpu.memory_space<smem>>
    %394 = vector.extract_strided_slice %362 {offsets = [0, 6], sizes = [16, 16], strides = [1, 1]} : vector<16x22xf32> to vector<16x16xf32>
    %395 = vector.broadcast %393 : f32 to vector<16x16xf32>
    %396 = arith.mulf %395, %394 : vector<16x16xf32>
    %397 = arith.addf %392, %396 : vector<16x16xf32>
    %c1_182 = arith.constant 1 : index
    %c0_183 = arith.constant 0 : index
    %c0_184 = arith.constant 0 : index
    %398 = vector.load %arg6[%c1_182, %c0_183, %c0_184] : memref<2x22x22xf32, #tpu.memory_space<vmem>>, vector<1x16x22xf32>
    %399 = vector.shape_cast %398 : vector<1x16x22xf32> to vector<16x22xf32>
    %c49 = arith.constant 49 : index
    %400 = memref.load %arg1[%c49] : memref<98xf32, #tpu.memory_space<smem>>
    %401 = vector.extract_strided_slice %399 {offsets = [0, 0], sizes = [16, 16], strides = [1, 1]} : vector<16x22xf32> to vector<16x16xf32>
    %402 = vector.broadcast %400 : f32 to vector<16x16xf32>
    %403 = arith.mulf %402, %401 : vector<16x16xf32>
    %404 = arith.addf %397, %403 : vector<16x16xf32>
    %c50 = arith.constant 50 : index
    %405 = memref.load %arg1[%c50] : memref<98xf32, #tpu.memory_space<smem>>
    %406 = vector.extract_strided_slice %399 {offsets = [0, 1], sizes = [16, 16], strides = [1, 1]} : vector<16x22xf32> to vector<16x16xf32>
    %407 = vector.broadcast %405 : f32 to vector<16x16xf32>
    %408 = arith.mulf %407, %406 : vector<16x16xf32>
    %409 = arith.addf %404, %408 : vector<16x16xf32>
    %c51 = arith.constant 51 : index
    %410 = memref.load %arg1[%c51] : memref<98xf32, #tpu.memory_space<smem>>
    %411 = vector.extract_strided_slice %399 {offsets = [0, 2], sizes = [16, 16], strides = [1, 1]} : vector<16x22xf32> to vector<16x16xf32>
    %412 = vector.broadcast %410 : f32 to vector<16x16xf32>
    %413 = arith.mulf %412, %411 : vector<16x16xf32>
    %414 = arith.addf %409, %413 : vector<16x16xf32>
    %c52 = arith.constant 52 : index
    %415 = memref.load %arg1[%c52] : memref<98xf32, #tpu.memory_space<smem>>
    %416 = vector.extract_strided_slice %399 {offsets = [0, 3], sizes = [16, 16], strides = [1, 1]} : vector<16x22xf32> to vector<16x16xf32>
    %417 = vector.broadcast %415 : f32 to vector<16x16xf32>
    %418 = arith.mulf %417, %416 : vector<16x16xf32>
    %419 = arith.addf %414, %418 : vector<16x16xf32>
    %c53 = arith.constant 53 : index
    %420 = memref.load %arg1[%c53] : memref<98xf32, #tpu.memory_space<smem>>
    %421 = vector.extract_strided_slice %399 {offsets = [0, 4], sizes = [16, 16], strides = [1, 1]} : vector<16x22xf32> to vector<16x16xf32>
    %422 = vector.broadcast %420 : f32 to vector<16x16xf32>
    %423 = arith.mulf %422, %421 : vector<16x16xf32>
    %424 = arith.addf %419, %423 : vector<16x16xf32>
    %c54 = arith.constant 54 : index
    %425 = memref.load %arg1[%c54] : memref<98xf32, #tpu.memory_space<smem>>
    %426 = vector.extract_strided_slice %399 {offsets = [0, 5], sizes = [16, 16], strides = [1, 1]} : vector<16x22xf32> to vector<16x16xf32>
    %427 = vector.broadcast %425 : f32 to vector<16x16xf32>
    %428 = arith.mulf %427, %426 : vector<16x16xf32>
    %429 = arith.addf %424, %428 : vector<16x16xf32>
    %c55 = arith.constant 55 : index
    %430 = memref.load %arg1[%c55] : memref<98xf32, #tpu.memory_space<smem>>
    %431 = vector.extract_strided_slice %399 {offsets = [0, 6], sizes = [16, 16], strides = [1, 1]} : vector<16x22xf32> to vector<16x16xf32>
    %432 = vector.broadcast %430 : f32 to vector<16x16xf32>
    %433 = arith.mulf %432, %431 : vector<16x16xf32>
    %434 = arith.addf %429, %433 : vector<16x16xf32>
    %c1_185 = arith.constant 1 : index
    %c1_186 = arith.constant 1 : index
    %c0_187 = arith.constant 0 : index
    %435 = vector.load %arg6[%c1_185, %c1_186, %c0_187] : memref<2x22x22xf32, #tpu.memory_space<vmem>>, vector<1x16x22xf32>
    %436 = vector.shape_cast %435 : vector<1x16x22xf32> to vector<16x22xf32>
    %c56 = arith.constant 56 : index
    %437 = memref.load %arg1[%c56] : memref<98xf32, #tpu.memory_space<smem>>
    %438 = vector.extract_strided_slice %436 {offsets = [0, 0], sizes = [16, 16], strides = [1, 1]} : vector<16x22xf32> to vector<16x16xf32>
    %439 = vector.broadcast %437 : f32 to vector<16x16xf32>
    %440 = arith.mulf %439, %438 : vector<16x16xf32>
    %441 = arith.addf %434, %440 : vector<16x16xf32>
    %c57 = arith.constant 57 : index
    %442 = memref.load %arg1[%c57] : memref<98xf32, #tpu.memory_space<smem>>
    %443 = vector.extract_strided_slice %436 {offsets = [0, 1], sizes = [16, 16], strides = [1, 1]} : vector<16x22xf32> to vector<16x16xf32>
    %444 = vector.broadcast %442 : f32 to vector<16x16xf32>
    %445 = arith.mulf %444, %443 : vector<16x16xf32>
    %446 = arith.addf %441, %445 : vector<16x16xf32>
    %c58 = arith.constant 58 : index
    %447 = memref.load %arg1[%c58] : memref<98xf32, #tpu.memory_space<smem>>
    %448 = vector.extract_strided_slice %436 {offsets = [0, 2], sizes = [16, 16], strides = [1, 1]} : vector<16x22xf32> to vector<16x16xf32>
    %449 = vector.broadcast %447 : f32 to vector<16x16xf32>
    %450 = arith.mulf %449, %448 : vector<16x16xf32>
    %451 = arith.addf %446, %450 : vector<16x16xf32>
    %c59 = arith.constant 59 : index
    %452 = memref.load %arg1[%c59] : memref<98xf32, #tpu.memory_space<smem>>
    %453 = vector.extract_strided_slice %436 {offsets = [0, 3], sizes = [16, 16], strides = [1, 1]} : vector<16x22xf32> to vector<16x16xf32>
    %454 = vector.broadcast %452 : f32 to vector<16x16xf32>
    %455 = arith.mulf %454, %453 : vector<16x16xf32>
    %456 = arith.addf %451, %455 : vector<16x16xf32>
    %c60 = arith.constant 60 : index
    %457 = memref.load %arg1[%c60] : memref<98xf32, #tpu.memory_space<smem>>
    %458 = vector.extract_strided_slice %436 {offsets = [0, 4], sizes = [16, 16], strides = [1, 1]} : vector<16x22xf32> to vector<16x16xf32>
    %459 = vector.broadcast %457 : f32 to vector<16x16xf32>
    %460 = arith.mulf %459, %458 : vector<16x16xf32>
    %461 = arith.addf %456, %460 : vector<16x16xf32>
    %c61 = arith.constant 61 : index
    %462 = memref.load %arg1[%c61] : memref<98xf32, #tpu.memory_space<smem>>
    %463 = vector.extract_strided_slice %436 {offsets = [0, 5], sizes = [16, 16], strides = [1, 1]} : vector<16x22xf32> to vector<16x16xf32>
    %464 = vector.broadcast %462 : f32 to vector<16x16xf32>
    %465 = arith.mulf %464, %463 : vector<16x16xf32>
    %466 = arith.addf %461, %465 : vector<16x16xf32>
    %c62 = arith.constant 62 : index
    %467 = memref.load %arg1[%c62] : memref<98xf32, #tpu.memory_space<smem>>
    %468 = vector.extract_strided_slice %436 {offsets = [0, 6], sizes = [16, 16], strides = [1, 1]} : vector<16x22xf32> to vector<16x16xf32>
    %469 = vector.broadcast %467 : f32 to vector<16x16xf32>
    %470 = arith.mulf %469, %468 : vector<16x16xf32>
    %471 = arith.addf %466, %470 : vector<16x16xf32>
    %c1_188 = arith.constant 1 : index
    %c2_189 = arith.constant 2 : index
    %c0_190 = arith.constant 0 : index
    %472 = vector.load %arg6[%c1_188, %c2_189, %c0_190] : memref<2x22x22xf32, #tpu.memory_space<vmem>>, vector<1x16x22xf32>
    %473 = vector.shape_cast %472 : vector<1x16x22xf32> to vector<16x22xf32>
    %c63 = arith.constant 63 : index
    %474 = memref.load %arg1[%c63] : memref<98xf32, #tpu.memory_space<smem>>
    %475 = vector.extract_strided_slice %473 {offsets = [0, 0], sizes = [16, 16], strides = [1, 1]} : vector<16x22xf32> to vector<16x16xf32>
    %476 = vector.broadcast %474 : f32 to vector<16x16xf32>
    %477 = arith.mulf %476, %475 : vector<16x16xf32>
    %478 = arith.addf %471, %477 : vector<16x16xf32>
    %c64_191 = arith.constant 64 : index
    %479 = memref.load %arg1[%c64_191] : memref<98xf32, #tpu.memory_space<smem>>
    %480 = vector.extract_strided_slice %473 {offsets = [0, 1], sizes = [16, 16], strides = [1, 1]} : vector<16x22xf32> to vector<16x16xf32>
    %481 = vector.broadcast %479 : f32 to vector<16x16xf32>
    %482 = arith.mulf %481, %480 : vector<16x16xf32>
    %483 = arith.addf %478, %482 : vector<16x16xf32>
    %c65 = arith.constant 65 : index
    %484 = memref.load %arg1[%c65] : memref<98xf32, #tpu.memory_space<smem>>
    %485 = vector.extract_strided_slice %473 {offsets = [0, 2], sizes = [16, 16], strides = [1, 1]} : vector<16x22xf32> to vector<16x16xf32>
    %486 = vector.broadcast %484 : f32 to vector<16x16xf32>
    %487 = arith.mulf %486, %485 : vector<16x16xf32>
    %488 = arith.addf %483, %487 : vector<16x16xf32>
    %c66 = arith.constant 66 : index
    %489 = memref.load %arg1[%c66] : memref<98xf32, #tpu.memory_space<smem>>
    %490 = vector.extract_strided_slice %473 {offsets = [0, 3], sizes = [16, 16], strides = [1, 1]} : vector<16x22xf32> to vector<16x16xf32>
    %491 = vector.broadcast %489 : f32 to vector<16x16xf32>
    %492 = arith.mulf %491, %490 : vector<16x16xf32>
    %493 = arith.addf %488, %492 : vector<16x16xf32>
    %c67 = arith.constant 67 : index
    %494 = memref.load %arg1[%c67] : memref<98xf32, #tpu.memory_space<smem>>
    %495 = vector.extract_strided_slice %473 {offsets = [0, 4], sizes = [16, 16], strides = [1, 1]} : vector<16x22xf32> to vector<16x16xf32>
    %496 = vector.broadcast %494 : f32 to vector<16x16xf32>
    %497 = arith.mulf %496, %495 : vector<16x16xf32>
    %498 = arith.addf %493, %497 : vector<16x16xf32>
    %c68 = arith.constant 68 : index
    %499 = memref.load %arg1[%c68] : memref<98xf32, #tpu.memory_space<smem>>
    %500 = vector.extract_strided_slice %473 {offsets = [0, 5], sizes = [16, 16], strides = [1, 1]} : vector<16x22xf32> to vector<16x16xf32>
    %501 = vector.broadcast %499 : f32 to vector<16x16xf32>
    %502 = arith.mulf %501, %500 : vector<16x16xf32>
    %503 = arith.addf %498, %502 : vector<16x16xf32>
    %c69 = arith.constant 69 : index
    %504 = memref.load %arg1[%c69] : memref<98xf32, #tpu.memory_space<smem>>
    %505 = vector.extract_strided_slice %473 {offsets = [0, 6], sizes = [16, 16], strides = [1, 1]} : vector<16x22xf32> to vector<16x16xf32>
    %506 = vector.broadcast %504 : f32 to vector<16x16xf32>
    %507 = arith.mulf %506, %505 : vector<16x16xf32>
    %508 = arith.addf %503, %507 : vector<16x16xf32>
    %c1_192 = arith.constant 1 : index
    %c3_193 = arith.constant 3 : index
    %c0_194 = arith.constant 0 : index
    %509 = vector.load %arg6[%c1_192, %c3_193, %c0_194] : memref<2x22x22xf32, #tpu.memory_space<vmem>>, vector<1x16x22xf32>
    %510 = vector.shape_cast %509 : vector<1x16x22xf32> to vector<16x22xf32>
    %c70 = arith.constant 70 : index
    %511 = memref.load %arg1[%c70] : memref<98xf32, #tpu.memory_space<smem>>
    %512 = vector.extract_strided_slice %510 {offsets = [0, 0], sizes = [16, 16], strides = [1, 1]} : vector<16x22xf32> to vector<16x16xf32>
    %513 = vector.broadcast %511 : f32 to vector<16x16xf32>
    %514 = arith.mulf %513, %512 : vector<16x16xf32>
    %515 = arith.addf %508, %514 : vector<16x16xf32>
    %c71 = arith.constant 71 : index
    %516 = memref.load %arg1[%c71] : memref<98xf32, #tpu.memory_space<smem>>
    %517 = vector.extract_strided_slice %510 {offsets = [0, 1], sizes = [16, 16], strides = [1, 1]} : vector<16x22xf32> to vector<16x16xf32>
    %518 = vector.broadcast %516 : f32 to vector<16x16xf32>
    %519 = arith.mulf %518, %517 : vector<16x16xf32>
    %520 = arith.addf %515, %519 : vector<16x16xf32>
    %c72 = arith.constant 72 : index
    %521 = memref.load %arg1[%c72] : memref<98xf32, #tpu.memory_space<smem>>
    %522 = vector.extract_strided_slice %510 {offsets = [0, 2], sizes = [16, 16], strides = [1, 1]} : vector<16x22xf32> to vector<16x16xf32>
    %523 = vector.broadcast %521 : f32 to vector<16x16xf32>
    %524 = arith.mulf %523, %522 : vector<16x16xf32>
    %525 = arith.addf %520, %524 : vector<16x16xf32>
    %c73 = arith.constant 73 : index
    %526 = memref.load %arg1[%c73] : memref<98xf32, #tpu.memory_space<smem>>
    %527 = vector.extract_strided_slice %510 {offsets = [0, 3], sizes = [16, 16], strides = [1, 1]} : vector<16x22xf32> to vector<16x16xf32>
    %528 = vector.broadcast %526 : f32 to vector<16x16xf32>
    %529 = arith.mulf %528, %527 : vector<16x16xf32>
    %530 = arith.addf %525, %529 : vector<16x16xf32>
    %c74 = arith.constant 74 : index
    %531 = memref.load %arg1[%c74] : memref<98xf32, #tpu.memory_space<smem>>
    %532 = vector.extract_strided_slice %510 {offsets = [0, 4], sizes = [16, 16], strides = [1, 1]} : vector<16x22xf32> to vector<16x16xf32>
    %533 = vector.broadcast %531 : f32 to vector<16x16xf32>
    %534 = arith.mulf %533, %532 : vector<16x16xf32>
    %535 = arith.addf %530, %534 : vector<16x16xf32>
    %c75 = arith.constant 75 : index
    %536 = memref.load %arg1[%c75] : memref<98xf32, #tpu.memory_space<smem>>
    %537 = vector.extract_strided_slice %510 {offsets = [0, 5], sizes = [16, 16], strides = [1, 1]} : vector<16x22xf32> to vector<16x16xf32>
    %538 = vector.broadcast %536 : f32 to vector<16x16xf32>
    %539 = arith.mulf %538, %537 : vector<16x16xf32>
    %540 = arith.addf %535, %539 : vector<16x16xf32>
    %c76 = arith.constant 76 : index
    %541 = memref.load %arg1[%c76] : memref<98xf32, #tpu.memory_space<smem>>
    %542 = vector.extract_strided_slice %510 {offsets = [0, 6], sizes = [16, 16], strides = [1, 1]} : vector<16x22xf32> to vector<16x16xf32>
    %543 = vector.broadcast %541 : f32 to vector<16x16xf32>
    %544 = arith.mulf %543, %542 : vector<16x16xf32>
    %545 = arith.addf %540, %544 : vector<16x16xf32>
    %c1_195 = arith.constant 1 : index
    %c4_196 = arith.constant 4 : index
    %c0_197 = arith.constant 0 : index
    %546 = vector.load %arg6[%c1_195, %c4_196, %c0_197] : memref<2x22x22xf32, #tpu.memory_space<vmem>>, vector<1x16x22xf32>
    %547 = vector.shape_cast %546 : vector<1x16x22xf32> to vector<16x22xf32>
    %c77 = arith.constant 77 : index
    %548 = memref.load %arg1[%c77] : memref<98xf32, #tpu.memory_space<smem>>
    %549 = vector.extract_strided_slice %547 {offsets = [0, 0], sizes = [16, 16], strides = [1, 1]} : vector<16x22xf32> to vector<16x16xf32>
    %550 = vector.broadcast %548 : f32 to vector<16x16xf32>
    %551 = arith.mulf %550, %549 : vector<16x16xf32>
    %552 = arith.addf %545, %551 : vector<16x16xf32>
    %c78 = arith.constant 78 : index
    %553 = memref.load %arg1[%c78] : memref<98xf32, #tpu.memory_space<smem>>
    %554 = vector.extract_strided_slice %547 {offsets = [0, 1], sizes = [16, 16], strides = [1, 1]} : vector<16x22xf32> to vector<16x16xf32>
    %555 = vector.broadcast %553 : f32 to vector<16x16xf32>
    %556 = arith.mulf %555, %554 : vector<16x16xf32>
    %557 = arith.addf %552, %556 : vector<16x16xf32>
    %c79 = arith.constant 79 : index
    %558 = memref.load %arg1[%c79] : memref<98xf32, #tpu.memory_space<smem>>
    %559 = vector.extract_strided_slice %547 {offsets = [0, 2], sizes = [16, 16], strides = [1, 1]} : vector<16x22xf32> to vector<16x16xf32>
    %560 = vector.broadcast %558 : f32 to vector<16x16xf32>
    %561 = arith.mulf %560, %559 : vector<16x16xf32>
    %562 = arith.addf %557, %561 : vector<16x16xf32>
    %c80_198 = arith.constant 80 : index
    %563 = memref.load %arg1[%c80_198] : memref<98xf32, #tpu.memory_space<smem>>
    %564 = vector.extract_strided_slice %547 {offsets = [0, 3], sizes = [16, 16], strides = [1, 1]} : vector<16x22xf32> to vector<16x16xf32>
    %565 = vector.broadcast %563 : f32 to vector<16x16xf32>
    %566 = arith.mulf %565, %564 : vector<16x16xf32>
    %567 = arith.addf %562, %566 : vector<16x16xf32>
    %c81 = arith.constant 81 : index
    %568 = memref.load %arg1[%c81] : memref<98xf32, #tpu.memory_space<smem>>
    %569 = vector.extract_strided_slice %547 {offsets = [0, 4], sizes = [16, 16], strides = [1, 1]} : vector<16x22xf32> to vector<16x16xf32>
    %570 = vector.broadcast %568 : f32 to vector<16x16xf32>
    %571 = arith.mulf %570, %569 : vector<16x16xf32>
    %572 = arith.addf %567, %571 : vector<16x16xf32>
    %c82 = arith.constant 82 : index
    %573 = memref.load %arg1[%c82] : memref<98xf32, #tpu.memory_space<smem>>
    %574 = vector.extract_strided_slice %547 {offsets = [0, 5], sizes = [16, 16], strides = [1, 1]} : vector<16x22xf32> to vector<16x16xf32>
    %575 = vector.broadcast %573 : f32 to vector<16x16xf32>
    %576 = arith.mulf %575, %574 : vector<16x16xf32>
    %577 = arith.addf %572, %576 : vector<16x16xf32>
    %c83 = arith.constant 83 : index
    %578 = memref.load %arg1[%c83] : memref<98xf32, #tpu.memory_space<smem>>
    %579 = vector.extract_strided_slice %547 {offsets = [0, 6], sizes = [16, 16], strides = [1, 1]} : vector<16x22xf32> to vector<16x16xf32>
    %580 = vector.broadcast %578 : f32 to vector<16x16xf32>
    %581 = arith.mulf %580, %579 : vector<16x16xf32>
    %582 = arith.addf %577, %581 : vector<16x16xf32>
    %c1_199 = arith.constant 1 : index
    %c5_200 = arith.constant 5 : index
    %c0_201 = arith.constant 0 : index
    %583 = vector.load %arg6[%c1_199, %c5_200, %c0_201] : memref<2x22x22xf32, #tpu.memory_space<vmem>>, vector<1x16x22xf32>
    %584 = vector.shape_cast %583 : vector<1x16x22xf32> to vector<16x22xf32>
    %c84 = arith.constant 84 : index
    %585 = memref.load %arg1[%c84] : memref<98xf32, #tpu.memory_space<smem>>
    %586 = vector.extract_strided_slice %584 {offsets = [0, 0], sizes = [16, 16], strides = [1, 1]} : vector<16x22xf32> to vector<16x16xf32>
    %587 = vector.broadcast %585 : f32 to vector<16x16xf32>
    %588 = arith.mulf %587, %586 : vector<16x16xf32>
    %589 = arith.addf %582, %588 : vector<16x16xf32>
    %c85 = arith.constant 85 : index
    %590 = memref.load %arg1[%c85] : memref<98xf32, #tpu.memory_space<smem>>
    %591 = vector.extract_strided_slice %584 {offsets = [0, 1], sizes = [16, 16], strides = [1, 1]} : vector<16x22xf32> to vector<16x16xf32>
    %592 = vector.broadcast %590 : f32 to vector<16x16xf32>
    %593 = arith.mulf %592, %591 : vector<16x16xf32>
    %594 = arith.addf %589, %593 : vector<16x16xf32>
    %c86 = arith.constant 86 : index
    %595 = memref.load %arg1[%c86] : memref<98xf32, #tpu.memory_space<smem>>
    %596 = vector.extract_strided_slice %584 {offsets = [0, 2], sizes = [16, 16], strides = [1, 1]} : vector<16x22xf32> to vector<16x16xf32>
    %597 = vector.broadcast %595 : f32 to vector<16x16xf32>
    %598 = arith.mulf %597, %596 : vector<16x16xf32>
    %599 = arith.addf %594, %598 : vector<16x16xf32>
    %c87 = arith.constant 87 : index
    %600 = memref.load %arg1[%c87] : memref<98xf32, #tpu.memory_space<smem>>
    %601 = vector.extract_strided_slice %584 {offsets = [0, 3], sizes = [16, 16], strides = [1, 1]} : vector<16x22xf32> to vector<16x16xf32>
    %602 = vector.broadcast %600 : f32 to vector<16x16xf32>
    %603 = arith.mulf %602, %601 : vector<16x16xf32>
    %604 = arith.addf %599, %603 : vector<16x16xf32>
    %c88 = arith.constant 88 : index
    %605 = memref.load %arg1[%c88] : memref<98xf32, #tpu.memory_space<smem>>
    %606 = vector.extract_strided_slice %584 {offsets = [0, 4], sizes = [16, 16], strides = [1, 1]} : vector<16x22xf32> to vector<16x16xf32>
    %607 = vector.broadcast %605 : f32 to vector<16x16xf32>
    %608 = arith.mulf %607, %606 : vector<16x16xf32>
    %609 = arith.addf %604, %608 : vector<16x16xf32>
    %c89 = arith.constant 89 : index
    %610 = memref.load %arg1[%c89] : memref<98xf32, #tpu.memory_space<smem>>
    %611 = vector.extract_strided_slice %584 {offsets = [0, 5], sizes = [16, 16], strides = [1, 1]} : vector<16x22xf32> to vector<16x16xf32>
    %612 = vector.broadcast %610 : f32 to vector<16x16xf32>
    %613 = arith.mulf %612, %611 : vector<16x16xf32>
    %614 = arith.addf %609, %613 : vector<16x16xf32>
    %c90 = arith.constant 90 : index
    %615 = memref.load %arg1[%c90] : memref<98xf32, #tpu.memory_space<smem>>
    %616 = vector.extract_strided_slice %584 {offsets = [0, 6], sizes = [16, 16], strides = [1, 1]} : vector<16x22xf32> to vector<16x16xf32>
    %617 = vector.broadcast %615 : f32 to vector<16x16xf32>
    %618 = arith.mulf %617, %616 : vector<16x16xf32>
    %619 = arith.addf %614, %618 : vector<16x16xf32>
    %c1_202 = arith.constant 1 : index
    %c6_203 = arith.constant 6 : index
    %c0_204 = arith.constant 0 : index
    %620 = vector.load %arg6[%c1_202, %c6_203, %c0_204] : memref<2x22x22xf32, #tpu.memory_space<vmem>>, vector<1x16x22xf32>
    %621 = vector.shape_cast %620 : vector<1x16x22xf32> to vector<16x22xf32>
    %c91 = arith.constant 91 : index
    %622 = memref.load %arg1[%c91] : memref<98xf32, #tpu.memory_space<smem>>
    %623 = vector.extract_strided_slice %621 {offsets = [0, 0], sizes = [16, 16], strides = [1, 1]} : vector<16x22xf32> to vector<16x16xf32>
    %624 = vector.broadcast %622 : f32 to vector<16x16xf32>
    %625 = arith.mulf %624, %623 : vector<16x16xf32>
    %626 = arith.addf %619, %625 : vector<16x16xf32>
    %c92 = arith.constant 92 : index
    %627 = memref.load %arg1[%c92] : memref<98xf32, #tpu.memory_space<smem>>
    %628 = vector.extract_strided_slice %621 {offsets = [0, 1], sizes = [16, 16], strides = [1, 1]} : vector<16x22xf32> to vector<16x16xf32>
    %629 = vector.broadcast %627 : f32 to vector<16x16xf32>
    %630 = arith.mulf %629, %628 : vector<16x16xf32>
    %631 = arith.addf %626, %630 : vector<16x16xf32>
    %c93 = arith.constant 93 : index
    %632 = memref.load %arg1[%c93] : memref<98xf32, #tpu.memory_space<smem>>
    %633 = vector.extract_strided_slice %621 {offsets = [0, 2], sizes = [16, 16], strides = [1, 1]} : vector<16x22xf32> to vector<16x16xf32>
    %634 = vector.broadcast %632 : f32 to vector<16x16xf32>
    %635 = arith.mulf %634, %633 : vector<16x16xf32>
    %636 = arith.addf %631, %635 : vector<16x16xf32>
    %c94 = arith.constant 94 : index
    %637 = memref.load %arg1[%c94] : memref<98xf32, #tpu.memory_space<smem>>
    %638 = vector.extract_strided_slice %621 {offsets = [0, 3], sizes = [16, 16], strides = [1, 1]} : vector<16x22xf32> to vector<16x16xf32>
    %639 = vector.broadcast %637 : f32 to vector<16x16xf32>
    %640 = arith.mulf %639, %638 : vector<16x16xf32>
    %641 = arith.addf %636, %640 : vector<16x16xf32>
    %c95 = arith.constant 95 : index
    %642 = memref.load %arg1[%c95] : memref<98xf32, #tpu.memory_space<smem>>
    %643 = vector.extract_strided_slice %621 {offsets = [0, 4], sizes = [16, 16], strides = [1, 1]} : vector<16x22xf32> to vector<16x16xf32>
    %644 = vector.broadcast %642 : f32 to vector<16x16xf32>
    %645 = arith.mulf %644, %643 : vector<16x16xf32>
    %646 = arith.addf %641, %645 : vector<16x16xf32>
    %c96_205 = arith.constant 96 : index
    %647 = memref.load %arg1[%c96_205] : memref<98xf32, #tpu.memory_space<smem>>
    %648 = vector.extract_strided_slice %621 {offsets = [0, 5], sizes = [16, 16], strides = [1, 1]} : vector<16x22xf32> to vector<16x16xf32>
    %649 = vector.broadcast %647 : f32 to vector<16x16xf32>
    %650 = arith.mulf %649, %648 : vector<16x16xf32>
    %651 = arith.addf %646, %650 : vector<16x16xf32>
    %c97 = arith.constant 97 : index
    %652 = memref.load %arg1[%c97] : memref<98xf32, #tpu.memory_space<smem>>
    %653 = vector.extract_strided_slice %621 {offsets = [0, 6], sizes = [16, 16], strides = [1, 1]} : vector<16x22xf32> to vector<16x16xf32>
    %654 = vector.broadcast %652 : f32 to vector<16x16xf32>
    %655 = arith.mulf %654, %653 : vector<16x16xf32>
    %656 = arith.addf %651, %655 : vector<16x16xf32>
    %657 = arith.negf %656 : vector<16x16xf32>
    %658 = math.exp %657 : vector<16x16xf32>
    %cst_206 = arith.constant 1.000000e+00 : f32
    %659 = vector.broadcast %cst_206 : f32 to vector<16x16xf32>
    %660 = arith.addf %659, %658 : vector<16x16xf32>
    %661 = arith.divf %659, %660 : vector<16x16xf32>
    %662 = vector.shape_cast %661 : vector<16x16xf32> to vector<1x16x16xf32>
    %c0_207 = arith.constant 0 : index
    %c0_208 = arith.constant 0 : index
    %c0_209 = arith.constant 0 : index
    %c0_210 = arith.constant 0 : index
    %663 = vector.load %arg3[%c0_207, %c0_208, %c0_209, %c0_210] : memref<1x1x16x16xf32, #tpu.memory_space<vmem>>, vector<1x1x16x16xf32>
    %664 = vector.shape_cast %663 : vector<1x1x16x16xf32> to vector<1x16x16xf32>
    %665 = vector.shape_cast %662 : vector<1x16x16xf32> to vector<1x1x16x16xf32>
    tpu.vector_store %arg3[%c0_207, %c0_208, %c0_209, %c0_210], %665 {strides = array<i32>} : memref<1x1x16x16xf32, #tpu.memory_space<vmem>>, vector<1x1x16x16xf32>,
    return
  }
  func.func @transform_0(%arg0: i32) -> i32 {
    %c0_i32 = arith.constant 0 : i32
    %c0_i32_0 = arith.constant 0 : i32
    return %c0_i32 : i32
  }
  func.func @transform_1(%arg0: i32) -> (i32, i32, i32) {
    %c0_i32 = arith.constant 0 : i32
    %c0_i32_0 = arith.constant 0 : i32
    %c0_i32_1 = arith.constant 0 : i32
    return %arg0, %c0_i32, %c0_i32_0 : i32, i32, i32
  }
  func.func @transform_2(%arg0: i32) -> (i32, i32, i32, i32) {
    %c0_i32 = arith.constant 0 : i32
    %c0_i32_0 = arith.constant 0 : i32
    %c0_i32_1 = arith.constant 0 : i32
    %c0_i32_2 = arith.constant 0 : i32
    return %arg0, %c0_i32, %c0_i32_0, %c0_i32_1 : i32, i32, i32, i32
  }
}

</mosaic_0001>

<llo_original>
// kernel: tpu_custom_call.1
$region0: #{tpu_custom_call.1}
  #allocation0 [shape = 'u32[]', space=smem, size = 0x4, offset = 0x4, fixed_abs, tag = 'smem constant byte address 0x4 - core index']
  #allocation1 [shape = 'u32[144,128]{1,0:T(1,128)}', space=vmem, size = 0x12000, scoped, tag = 'internal scratch']
  #allocation2 [shape = 'f32[1,256]{1,0:T(1,128)}', space=vmem, size = 0x400, scoped, tag = 'scratch operand']
  #allocation3 [shape = 'f32[1,256]{1,0:T(1,128)}', space=vmem, size = 0x400, scoped, tag = 'scratch operand']
  #allocation4 [shape = 'f32[2,22,22]{2,1,0:T(8,128)}', space=vmem, size = 0x6000, scoped, tag = 'scratch operand']
  %s0 = inlined_call_operand.hbm [shape: f32[98], index: 0, kind: input, shape index: {}]
  %s1 = inlined_call_operand.hbm [shape: f32[2,4,256], index: 1, kind: input, shape index: {}]
  %s2 = inlined_call_operand.hbm [shape: f32[2,1,16,16], index: 2, kind: output, shape index: {}]
  %s3 = sld [smem:[#allocation0]]
  $region49: #{tpu_custom_call.1} parent=0
    _
  %s5 = ssub.s32 1, %s3
  %s6 = scalar_select 0, %s5, %s3
  $region1: #{tpu_custom_call.1} parent=0
    #allocation5 [shape = 'u8[512]{0}', space=smem, size = 0x200, scoped, tag = 'input window, operand 0, single buffered']
    #allocation6 [shape = 's32[2]{0}', space=sflag, size = 0x8, scoped, tag = 'scoped memory for tpu_custom_call.1']
    #allocation7 [shape = 's32[2]{0}', space=sflag, size = 0x8, scoped, tag = 'scoped memory for tpu_custom_call.1']
    #allocation8 [shape = 's32[2]{0}', space=sflag, size = 0x8, scoped, tag = 'scoped memory for tpu_custom_call.1']
    #allocation9 [shape = 'u8[8192]{0}', space=vmem, size = 0x2000, scoped, tag = 'input window, operand 1']
    #allocation10 [shape = 'u8[16384]{0}', space=vmem, size = 0x4000, scoped, tag = 'output window, operand 0']
    %7 = vsyncpa [#allocation8], 0
    %8 = vsyncpa [#allocation6], 0
    %s9 = scalar_lea.sflag [#allocation6], 1
    %10 = vsyncpa %s9, 0
    %11 = vsyncpa [#allocation7], 0
    %s12 = scalar_lea.sflag [#allocation7], 1
    %13 = vsyncpa %s12, 0
    loop: start=0, step=1, limit=4
    $region2: #{tpu_custom_call.1} parent=1 // loop_pre_header
      _
    $region3: #{tpu_custom_call.1} parent=1 // loop_header
      %s15 = sphi 0, %s19
      %p16 = scmp.ge.s32.totalorder %s15, 4
      %s23 = sphi 0, %s23
      %s25 = sphi 0, %s23
      %s26 = sphi 0, %s25
      %s40 = sphi 0, %s26
      %s46 = sphi 0, %s48
      %s49 = sphi 0, %s46
      %s50 = sphi 0, %s49
      %s66 = sphi 0, %s50
      %s72 = sphi 0, %s74
      %s75 = sphi 0, %s72
      %s76 = sphi 0, %s75
      %s92 = sphi 0, %s76
    $region4: #{tpu_custom_call.1} parent=1 // loop_header_branch
      %18 = sbr.rel (%p16) target = $region8
    $region5: #{tpu_custom_call.1} parent=1 // loop_body
      %s20 = ssub.s32 %s15, 1
      %s21 = ssub.s32 %s15, 2
      %s22 = sadd.s32 %s15, 1
      %s24 = sadd.s32 %s23, 1
      %p27 = scmp.eq.s32.totalorder %s15, 1
      %p28 = scmp.ne.s32.totalorder %s23, %s25
      %p29 = scmp.eq.s32.totalorder %s15, 0
      %p30 = por %p28, %p29
      %p31 = scmp.ne.s32.totalorder %s23, %s25
      %p32 = scmp.eq.s32.totalorder %s20, 1
      %p33 = por %p31, %p32
      %p34 = scmp.ne.s32.totalorder %s25, %s26
      %p35 = scmp.eq.s32.totalorder %s20, 0
      %p36 = por %p34, %p35
      %p37 = scmp.ne.s32.totalorder %s25, %s26
      %p38 = scmp.eq.s32.totalorder %s21, 1
      %p39 = por %p37, %p38
      %p41 = scmp.ne.s32.totalorder %s26, %s40
      %p42 = scmp.eq.s32.totalorder %s21, 0
      %p43 = por %p41, %p42
      %s44 = ssub.s32 %s15, %s22
      %p45 = scmp.eq.s32.totalorder %s44, 0
      %s47 = sadd.s32 %s46, 1
      %s48 = scalar_select %p45, %s46, %s47
      %p51 = pneg %p45
      %p52 = scmp.eq.s32.totalorder %s15, 1
      %p53 = por %p51, %p52
      %p54 = scmp.ne.s32.totalorder %s46, %s49
      %p55 = scmp.eq.s32.totalorder %s15, 0
      %p56 = por %p54, %p55
      %p57 = scmp.ne.s32.totalorder %s46, %s49
      %p58 = scmp.eq.s32.totalorder %s20, 1
      %p59 = por %p57, %p58
      %p60 = scmp.ne.s32.totalorder %s49, %s50
      %p61 = scmp.eq.s32.totalorder %s20, 0
      %p62 = por %p60, %p61
      %p63 = scmp.ne.s32.totalorder %s49, %s50
      %p64 = scmp.eq.s32.totalorder %s21, 1
      %p65 = por %p63, %p64
      %p67 = scmp.ne.s32.totalorder %s50, %s66
      %p68 = scmp.eq.s32.totalorder %s21, 0
      %p69 = por %p67, %p68
      %s70 = ssub.s32 %s15, %s22
      %p71 = scmp.eq.s32.totalorder %s70, 0
      %s73 = sadd.s32 %s72, 1
      %s74 = scalar_select %p71, %s72, %s73
      %p77 = pneg %p71
      %p78 = scmp.eq.s32.totalorder %s15, 1
      %p79 = por %p77, %p78
      %p80 = scmp.ne.s32.totalorder %s72, %s75
      %p81 = scmp.eq.s32.totalorder %s15, 0
      %p82 = por %p80, %p81
      %p83 = scmp.ne.s32.totalorder %s72, %s75
      %p84 = scmp.eq.s32.totalorder %s20, 1
      %p85 = por %p83, %p84
      %p86 = scmp.ne.s32.totalorder %s75, %s76
      %p87 = scmp.eq.s32.totalorder %s20, 0
      %p88 = por %p86, %p87
      %p89 = scmp.ne.s32.totalorder %s75, %s76
      %p90 = scmp.eq.s32.totalorder %s21, 1
      %p91 = por %p89, %p90
      %p93 = scmp.ne.s32.totalorder %s76, %s92
      %p94 = scmp.eq.s32.totalorder %s21, 0
      %p95 = por %p93, %p94
      %p96 = scmp.le.s32.totalorder 1, %s15
      %p97 = scmp.lt.s32.totalorder %s15, 3
      %p98 = pnand %p96, %p97
      %p99 = pneg %p98
      // Predicated region
      $region9: #{tpu_custom_call.1} parent=5 // pred_check
        _
      $region10: #{tpu_custom_call.1} parent=5 // pred_check_branch
        %101 = sbr.rel (%p98) target = $region12
      $region11: #{tpu_custom_call.1} parent=5 // pred_region
        %s102 = ssub.s32 %s15, 1
        // Predicated region
        $region13: #{tpu_custom_call.1} parent=11 // pred_check
          %p103 = pneg %p36
        $region14: #{tpu_custom_call.1} parent=11 // pred_check_branch
          %105 = sbr.rel (%p103) target = $region16
        $region15: #{tpu_custom_call.1} parent=11 // pred_region
          %s107 = ssub.s32 16, 16
          %108 = vsyncadd [#allocation8], %s107
          %111 = dma.hbm_to_smem %s0, 16, [#allocation5], [#allocation8]
        $region16: #{tpu_custom_call.1} parent=11 // pred_fallthru
          _
      $region12: #{tpu_custom_call.1} parent=5 // pred_fallthru
        _
      %p112 = scmp.lt.s32.totalorder %s15, 2
      // Predicated region
      $region17: #{tpu_custom_call.1} parent=5 // pred_check
        %p113 = pneg %p112
      $region18: #{tpu_custom_call.1} parent=5 // pred_check_branch
        %115 = sbr.rel (%p113) target = $region20
      $region19: #{tpu_custom_call.1} parent=5 // pred_region
        // Predicated region
        $region21: #{tpu_custom_call.1} parent=19 // pred_check
          %p116 = pneg %p56
        $region22: #{tpu_custom_call.1} parent=19 // pred_check_branch
          %118 = sbr.rel (%p116) target = $region24
        $region23: #{tpu_custom_call.1} parent=19 // pred_region
          %s119 = sand.u32 %s46, 1
          %s120 = scalar_lea.sflag [#allocation6], %s119
          %s121 = sand.u32 %s46, 1
          %s122 = smul.addr %s121, 8
          %s123 = scalar_lea.vmem [#allocation9], %s122
          %s125 = ssub.s32 128, 128
          %126 = vsyncadd %s120, %s125
          %s127 = smul.addr %s15, 2
          %s128 = smul.addr %s127, 64
          %s129 = scalar_lea.hbm %s1, %s128
          %s131 = sshll.u32 %s123, 4
          %s132 = int_to_ptr.vmem [resolvable:$true] %s131
          %134 = dma.hbm_to_vmem [thread:$0]  %s129, 128, %s132, %s120
        $region24: #{tpu_custom_call.1} parent=19 // pred_fallthru
          _
      $region20: #{tpu_custom_call.1} parent=5 // pred_fallthru
        _
      %p135 = scmp.le.s32.totalorder 1, %s15
      %p136 = scmp.lt.s32.totalorder %s15, 3
      %p137 = pnand %p135, %p136
      %p138 = pneg %p137
      // Predicated region
      $region25: #{tpu_custom_call.1} parent=5 // pred_check
        _
      $region26: #{tpu_custom_call.1} parent=5 // pred_check_branch
        %140 = sbr.rel (%p137) target = $region28
      $region27: #{tpu_custom_call.1} parent=5 // pred_region
        %s141 = ssub.s32 %s15, 1
        // Predicated region
        $region29: #{tpu_custom_call.1} parent=27 // pred_check
          %p142 = pneg %p36
        $region30: #{tpu_custom_call.1} parent=27 // pred_check_branch
          %144 = sbr.rel (%p142) target = $region32
        $region31: #{tpu_custom_call.1} parent=27 // pred_region
          %145 = dma.done [#allocation8], 16
        $region32: #{tpu_custom_call.1} parent=27 // pred_fallthru
          _
        %s146 = sand.u32 %s49, 1
        %s147 = scalar_lea.sflag [#allocation6], %s146
        %s148 = sand.u32 %s49, 1
        %s149 = smul.addr %s148, 8
        %s150 = scalar_lea.vmem [#allocation9], %s149
        // Predicated region
        $region33: #{tpu_custom_call.1} parent=27 // pred_check
          %p151 = pneg %p62
        $region34: #{tpu_custom_call.1} parent=27 // pred_check_branch
          %153 = sbr.rel (%p151) target = $region36
        $region35: #{tpu_custom_call.1} parent=27 // pred_region
          %154 = dma.done %s147, 128
        $region36: #{tpu_custom_call.1} parent=27 // pred_fallthru
          _
        %155 = sfence
        %p156 = pneg %p36
        %p157 = pneg %p33
        %s158 = sand.u32 %s49, 1
        %s159 = scalar_lea.sflag [#allocation6], %s158
        %s160 = sand.u32 %s49, 1
        %s161 = smul.addr %s160, 8
        %s162 = scalar_lea.vmem [#allocation9], %s161
        %p163 = pneg %p62
        %p164 = pneg %p59
        %p165 = pneg %p88
        %p166 = pneg %p85
        %s167 = sand.u32 %s75, 1
        %s168 = scalar_lea.sflag [#allocation7], %s167
        %s169 = sand.u32 %s75, 1
        %s170 = smul.addr %s169, 16
        %s171 = scalar_lea.vmem [#allocation10], %s170
        %v172 = vld [vmem:[%s150] sm:$0xff]
        %v174 = vcombine.high %v172, %v172
        %vm176 = vcmask 1043456
        %v177 = vsel %vm176, %v172, -inf
        %v178 = vrot.slane %v177, 4
        %v179 = vmax.f32 %v177, %v178
        %v180 = vrot.slane %v179, 2
        %v181 = vmax.f32 %v179, %v180
        %v182 = vrot.slane %v181, 1
        %v183 = vmax.f32 %v181, %v182
        %v184 = vsel %vm176, %v174, -inf
        %v185 = vrot.slane %v184, 4
        %v186 = vmax.f32 %v184, %v185
        %v187 = vrot.slane %v186, 2
        %v188 = vmax.f32 %v186, %v187
        %v189 = vrot.slane %v188, 1
        %v190 = vmax.f32 %v188, %v189
        %v193 = vcombine.low %v183, %v190
        %v195 = vunpack.c.l.s4 1966171168
        %v196 = vunpack.c.0.s8 %v195
        %v197 = vlaneseq
        %v198 = vshrl.u32 %v197, 7
        %v199 = vsub.s32 %v196, %v198
        %v200 = vrot.slane %v193, %v199
        %v202 = vunpack.c.l.s4 1966171168
        %v203 = vunpack.c.0.s8 %v202
        %v204 = vlaneseq
        %v205 = vshrl.u32 %v204, 7
        %v206 = vsub.s32 %v203, %v205
        %v207 = vrot.slane %v200, %v206
        %v209 = vlaneseq
        %vm210 = vcmp.ge.s32.totalorder %v209, 0
        %vm211 = vcmp.lt.s32.totalorder %v209, 256
        %vm212 = vmand %vm210, %vm211
        %213 = vst.msk [vmem:[#allocation3] sm:$0x3] %vm212, %v207
        %v214 = vsel %vm176, %v172, 0.0
        %v215 = vrot.slane %v214, 4
        %v216 = vadd.f32 %v214, %v215
        %v217 = vrot.slane %v216, 2
        %v218 = vadd.f32 %v216, %v217
        %v219 = vrot.slane %v218, 1
        %v220 = vadd.f32 %v218, %v219
        %v221 = vsel %vm176, %v174, 0.0
        %v222 = vrot.slane %v221, 4
        %v223 = vadd.f32 %v221, %v222
        %v224 = vrot.slane %v223, 2
        %v225 = vadd.f32 %v223, %v224
        %v226 = vrot.slane %v225, 1
        %v227 = vadd.f32 %v225, %v226
        %v230 = vcombine.low %v220, %v227
        %v232 = vunpack.c.l.s4 1966171168
        %v233 = vunpack.c.0.s8 %v232
        %v234 = vlaneseq
        %v235 = vshrl.u32 %v234, 7
        %v236 = vsub.s32 %v233, %v235
        %v237 = vrot.slane %v230, %v236
        %v239 = vunpack.c.l.s4 1966171168
        %v240 = vunpack.c.0.s8 %v239
        %v241 = vlaneseq
        %v242 = vshrl.u32 %v241, 7
        %v243 = vsub.s32 %v240, %v242
        %v244 = vrot.slane %v237, %v243
        %246 = vst.msk [vmem:[#allocation2] sm:$0x3] %vm212, %v244
        %vm247 = vcmask 179200
        %248 = vst.msk [vmem:[#allocation4] sm:$0xff] %vm247, 0.0
        %249 = vst.msk [vmem:[#allocation4 + $0x8] sm:$0xff] %vm247, 0.0
        %vm250 = vcmask 177152
        %251 = vst.msk [vmem:[#allocation4 + $0x10] sm:$0x3f] %vm250, 0.0
        %252 = vst.msk [vmem:[#allocation4 + $0x18] sm:$0xff] %vm247, 0.0
        %253 = vst.msk [vmem:[#allocation4 + $0x20] sm:$0xff] %vm247, 0.0
        %254 = vst.msk [vmem:[#allocation4 + $0x28] sm:$0x3f] %vm250, 0.0
        %v255 = vld [vmem:[#allocation2] sm:$0x1]
        %v257 = vlaneseq
        %v258 = vshrl.u32 %v257, 7
        %v259 = vsub.s32 0, %v258
        %v260 = vrot.slane %v255, %v259
        %261 = vrot.lane.b32.xlu0 %v260, 3
        %v262 = vpop.permute.xlu0 %261
        %vm264 = vcmask 147480
        %265 = vst.msk [vmem:[#allocation4 + $0x3] sm:$0x1] %vm264, %v262
        %v266 = vld [vmem:[#allocation2] sm:$0x1]
        %v268 = vlaneseq
        %v269 = vshrl.u32 %v268, 7
        %v270 = vsub.s32 0, %v269
        %v271 = vrot.slane %v266, %v270
        %272 = vrot.lane.b32.xlu0 %v271, 115
        %v273 = vpop.permute.xlu0 %272
        %275 = vst.msk [vmem:[#allocation4 + $0x4] sm:$0x1] %vm264, %v273
        %v276 = vld [vmem:[#allocation2] sm:$0x1]
        %v278 = vlaneseq
        %v279 = vshrl.u32 %v278, 7
        %v280 = vsub.s32 0, %v279
        %v281 = vrot.slane %v276, %v280
        %282 = vrot.lane.b32.xlu0 %v281, 99
        %v283 = vpop.permute.xlu0 %282
        %285 = vst.msk [vmem:[#allocation4 + $0x5] sm:$0x1] %vm264, %v283
        %v286 = vld [vmem:[#allocation2] sm:$0x1]
        %v288 = vlaneseq
        %v289 = vshrl.u32 %v288, 7
        %v290 = vsub.s32 0, %v289
        %v291 = vrot.slane %v286, %v290
        %292 = vrot.lane.b32.xlu0 %v291, 83
        %v293 = vpop.permute.xlu0 %292
        %295 = vst.msk [vmem:[#allocation4 + $0x6] sm:$0x1] %vm264, %v293
        %v296 = vld [vmem:[#allocation2] sm:$0x1]
        %v298 = vlaneseq
        %v299 = vshrl.u32 %v298, 7
        %v300 = vsub.s32 0, %v299
        %v301 = vrot.slane %v296, %v300
        %302 = vrot.lane.b32.xlu0 %v301, 67
        %v303 = vpop.permute.xlu0 %302
        %305 = vst.msk [vmem:[#allocation4 + $0x7] sm:$0x1] %vm264, %v303
        %v306 = vld [vmem:[#allocation2] sm:$0x1]
        %v308 = vlaneseq
        %v309 = vshrl.u32 %v308, 7
        %v310 = vsub.s32 0, %v309
        %v311 = vrot.slane %v306, %v310
        %312 = vrot.lane.b32.xlu0 %v311, 51
        %v313 = vpop.permute.xlu0 %312
        %315 = vst.msk [vmem:[#allocation4 + $0x8] sm:$0x1] %vm264, %v313
        %v316 = vld [vmem:[#allocation2] sm:$0x1]
        %v318 = vlaneseq
        %v319 = vshrl.u32 %v318, 7
        %v320 = vsub.s32 0, %v319
        %v321 = vrot.slane %v316, %v320
        %322 = vrot.lane.b32.xlu0 %v321, 35
        %v323 = vpop.permute.xlu0 %322
        %325 = vst.msk [vmem:[#allocation4 + $0x9] sm:$0x1] %vm264, %v323
        %v326 = vld [vmem:[#allocation2] sm:$0x1]
        %v328 = vlaneseq
        %v329 = vshrl.u32 %v328, 7
        %v330 = vsub.s32 0, %v329
        %v331 = vrot.slane %v326, %v330
        %332 = vrot.lane.b32.xlu0 %v331, 19
        %v333 = vpop.permute.xlu0 %332
        %335 = vst.msk [vmem:[#allocation4 + $0xa] sm:$0x1] %vm264, %v333
        %v336 = vld [vmem:[#allocation2 + $0x1] sm:$0x1]
        %v338 = vlaneseq
        %v339 = vshrl.u32 %v338, 7
        %v340 = vsub.s32 0, %v339
        %v341 = vrot.slane %v336, %v340
        %342 = vrot.lane.b32.xlu0 %v341, 3
        %v343 = vpop.permute.xlu0 %342
        %345 = vst.msk [vmem:[#allocation4 + $0xb] sm:$0x1] %vm264, %v343
        %v346 = vld [vmem:[#allocation2 + $0x1] sm:$0x1]
        %v348 = vlaneseq
        %v349 = vshrl.u32 %v348, 7
        %v350 = vsub.s32 0, %v349
        %v351 = vrot.slane %v346, %v350
        %352 = vrot.lane.b32.xlu0 %v351, 115
        %v353 = vpop.permute.xlu0 %352
        %355 = vst.msk [vmem:[#allocation4 + $0xc] sm:$0x1] %vm264, %v353
        %v356 = vld [vmem:[#allocation2 + $0x1] sm:$0x1]
        %v358 = vlaneseq
        %v359 = vshrl.u32 %v358, 7
        %v360 = vsub.s32 0, %v359
        %v361 = vrot.slane %v356, %v360
        %362 = vrot.lane.b32.xlu0 %v361, 99
        %v363 = vpop.permute.xlu0 %362
        %365 = vst.msk [vmem:[#allocation4 + $0xd] sm:$0x1] %vm264, %v363
        %v366 = vld [vmem:[#allocation2 + $0x1] sm:$0x1]
        %v368 = vlaneseq
        %v369 = vshrl.u32 %v368, 7
        %v370 = vsub.s32 0, %v369
        %v371 = vrot.slane %v366, %v370
        %372 = vrot.lane.b32.xlu0 %v371, 83
        %v373 = vpop.permute.xlu0 %372
        %375 = vst.msk [vmem:[#allocation4 + $0xe] sm:$0x1] %vm264, %v373
        %v376 = vld [vmem:[#allocation2 + $0x1] sm:$0x1]
        %v378 = vlaneseq
        %v379 = vshrl.u32 %v378, 7
        %v380 = vsub.s32 0, %v379
        %v381 = vrot.slane %v376, %v380
        %382 = vrot.lane.b32.xlu0 %v381, 67
        %v383 = vpop.permute.xlu0 %382
        %385 = vst.msk [vmem:[#allocation4 + $0xf] sm:$0x1] %vm264, %v383
        %v386 = vld [vmem:[#allocation2 + $0x1] sm:$0x1]
        %v388 = vlaneseq
        %v389 = vshrl.u32 %v388, 7
        %v390 = vsub.s32 0, %v389
        %v391 = vrot.slane %v386, %v390
        %392 = vrot.lane.b32.xlu0 %v391, 51
        %v393 = vpop.permute.xlu0 %392
        %395 = vst.msk [vmem:[#allocation4 + $0x10] sm:$0x1] %vm264, %v393
        %v396 = vld [vmem:[#allocation2 + $0x1] sm:$0x1]
        %v398 = vlaneseq
        %v399 = vshrl.u32 %v398, 7
        %v400 = vsub.s32 0, %v399
        %v401 = vrot.slane %v396, %v400
        %402 = vrot.lane.b32.xlu0 %v401, 35
        %v403 = vpop.permute.xlu0 %402
        %405 = vst.msk [vmem:[#allocation4 + $0x11] sm:$0x1] %vm264, %v403
        %v406 = vld [vmem:[#allocation2 + $0x1] sm:$0x1]
        %v408 = vlaneseq
        %v409 = vshrl.u32 %v408, 7
        %v410 = vsub.s32 0, %v409
        %v411 = vrot.slane %v406, %v410
        %412 = vrot.lane.b32.xlu0 %v411, 19
        %v413 = vpop.permute.xlu0 %412
        %415 = vst.msk [vmem:[#allocation4 + $0x12] sm:$0x1] %vm264, %v413
        %v416 = vld [vmem:[#allocation3] sm:$0x1]
        %v418 = vlaneseq
        %v419 = vshrl.u32 %v418, 7
        %v420 = vsub.s32 0, %v419
        %v421 = vrot.slane %v416, %v420
        %422 = vrot.lane.b32.xlu0 %v421, 3
        %v423 = vpop.permute.xlu0 %422
        %s425 = scalar_lea.vmem [#allocation4], 24
        %426 = vst.msk [vmem:[%s425 + $0x3] sm:$0x1] %vm264, %v423
        %v427 = vld [vmem:[#allocation3] sm:$0x1]
        %v429 = vlaneseq
        %v430 = vshrl.u32 %v429, 7
        %v431 = vsub.s32 0, %v430
        %v432 = vrot.slane %v427, %v431
        %433 = vrot.lane.b32.xlu0 %v432, 115
        %v434 = vpop.permute.xlu0 %433
        %436 = vst.msk [vmem:[%s425 + $0x4] sm:$0x1] %vm264, %v434
        %v437 = vld [vmem:[#allocation3] sm:$0x1]
        %v439 = vlaneseq
        %v440 = vshrl.u32 %v439, 7
        %v441 = vsub.s32 0, %v440
        %v442 = vrot.slane %v437, %v441
        %443 = vrot.lane.b32.xlu0 %v442, 99
        %v444 = vpop.permute.xlu0 %443
        %446 = vst.msk [vmem:[%s425 + $0x5] sm:$0x1] %vm264, %v444
        %v447 = vld [vmem:[#allocation3] sm:$0x1]
        %v449 = vlaneseq
        %v450 = vshrl.u32 %v449, 7
        %v451 = vsub.s32 0, %v450
        %v452 = vrot.slane %v447, %v451
        %453 = vrot.lane.b32.xlu0 %v452, 83
        %v454 = vpop.permute.xlu0 %453
        %456 = vst.msk [vmem:[%s425 + $0x6] sm:$0x1] %vm264, %v454
        %v457 = vld [vmem:[#allocation3] sm:$0x1]
        %v459 = vlaneseq
        %v460 = vshrl.u32 %v459, 7
        %v461 = vsub.s32 0, %v460
        %v462 = vrot.slane %v457, %v461
        %463 = vrot.lane.b32.xlu0 %v462, 67
        %v464 = vpop.permute.xlu0 %463
        %466 = vst.msk [vmem:[%s425 + $0x7] sm:$0x1] %vm264, %v464
        %v467 = vld [vmem:[#allocation3] sm:$0x1]
        %v469 = vlaneseq
        %v470 = vshrl.u32 %v469, 7
        %v471 = vsub.s32 0, %v470
        %v472 = vrot.slane %v467, %v471
        %473 = vrot.lane.b32.xlu0 %v472, 51
        %v474 = vpop.permute.xlu0 %473
        %476 = vst.msk [vmem:[%s425 + $0x8] sm:$0x1] %vm264, %v474
        %v477 = vld [vmem:[#allocation3] sm:$0x1]
        %v479 = vlaneseq
        %v480 = vshrl.u32 %v479, 7
        %v481 = vsub.s32 0, %v480
        %v482 = vrot.slane %v477, %v481
        %483 = vrot.lane.b32.xlu0 %v482, 35
        %v484 = vpop.permute.xlu0 %483
        %486 = vst.msk [vmem:[%s425 + $0x9] sm:$0x1] %vm264, %v484
        %v487 = vld [vmem:[#allocation3] sm:$0x1]
        %v489 = vlaneseq
        %v490 = vshrl.u32 %v489, 7
        %v491 = vsub.s32 0, %v490
        %v492 = vrot.slane %v487, %v491
        %493 = vrot.lane.b32.xlu0 %v492, 19
        %v494 = vpop.permute.xlu0 %493
        %496 = vst.msk [vmem:[%s425 + $0xa] sm:$0x1] %vm264, %v494
        %v497 = vld [vmem:[#allocation3 + $0x1] sm:$0x1]
        %v499 = vlaneseq
        %v500 = vshrl.u32 %v499, 7
        %v501 = vsub.s32 0, %v500
        %v502 = vrot.slane %v497, %v501
        %503 = vrot.lane.b32.xlu0 %v502, 3
        %v504 = vpop.permute.xlu0 %503
        %506 = vst.msk [vmem:[%s425 + $0xb] sm:$0x1] %vm264, %v504
        %v507 = vld [vmem:[#allocation3 + $0x1] sm:$0x1]
        %v509 = vlaneseq
        %v510 = vshrl.u32 %v509, 7
        %v511 = vsub.s32 0, %v510
        %v512 = vrot.slane %v507, %v511
        %513 = vrot.lane.b32.xlu0 %v512, 115
        %v514 = vpop.permute.xlu0 %513
        %516 = vst.msk [vmem:[%s425 + $0xc] sm:$0x1] %vm264, %v514
        %v517 = vld [vmem:[#allocation3 + $0x1] sm:$0x1]
        %v519 = vlaneseq
        %v520 = vshrl.u32 %v519, 7
        %v521 = vsub.s32 0, %v520
        %v522 = vrot.slane %v517, %v521
        %523 = vrot.lane.b32.xlu0 %v522, 99
        %v524 = vpop.permute.xlu0 %523
        %526 = vst.msk [vmem:[%s425 + $0xd] sm:$0x1] %vm264, %v524
        %v527 = vld [vmem:[#allocation3 + $0x1] sm:$0x1]
        %v529 = vlaneseq
        %v530 = vshrl.u32 %v529, 7
        %v531 = vsub.s32 0, %v530
        %v532 = vrot.slane %v527, %v531
        %533 = vrot.lane.b32.xlu0 %v532, 83
        %v534 = vpop.permute.xlu0 %533
        %536 = vst.msk [vmem:[%s425 + $0xe] sm:$0x1] %vm264, %v534
        %v537 = vld [vmem:[#allocation3 + $0x1] sm:$0x1]
        %v539 = vlaneseq
        %v540 = vshrl.u32 %v539, 7
        %v541 = vsub.s32 0, %v540
        %v542 = vrot.slane %v537, %v541
        %543 = vrot.lane.b32.xlu0 %v542, 67
        %v544 = vpop.permute.xlu0 %543
        %546 = vst.msk [vmem:[%s425 + $0xf] sm:$0x1] %vm264, %v544
        %v547 = vld [vmem:[#allocation3 + $0x1] sm:$0x1]
        %v549 = vlaneseq
        %v550 = vshrl.u32 %v549, 7
        %v551 = vsub.s32 0, %v550
        %v552 = vrot.slane %v547, %v551
        %553 = vrot.lane.b32.xlu0 %v552, 51
        %v554 = vpop.permute.xlu0 %553
        %556 = vst.msk [vmem:[%s425 + $0x10] sm:$0x1] %vm264, %v554
        %v557 = vld [vmem:[#allocation3 + $0x1] sm:$0x1]
        %v559 = vlaneseq
        %v560 = vshrl.u32 %v559, 7
        %v561 = vsub.s32 0, %v560
        %v562 = vrot.slane %v557, %v561
        %563 = vrot.lane.b32.xlu0 %v562, 35
        %v564 = vpop.permute.xlu0 %563
        %566 = vst.msk [vmem:[%s425 + $0x11] sm:$0x1] %vm264, %v564
        %v567 = vld [vmem:[#allocation3 + $0x1] sm:$0x1]
        %v569 = vlaneseq
        %v570 = vshrl.u32 %v569, 7
        %v571 = vsub.s32 0, %v570
        %v572 = vrot.slane %v567, %v571
        %573 = vrot.lane.b32.xlu0 %v572, 19
        %v574 = vpop.permute.xlu0 %573
        %576 = vst.msk [vmem:[%s425 + $0x12] sm:$0x1] %vm264, %v574
        %v577 = vld [vmem:[#allocation4] sm:$0xff]
        %v578 = vld [vmem:[#allocation4 + $0x8] sm:$0xff]
        %s579 = sld [smem:[#allocation5]]
        %v580 = vstv %s579
        %v581 = vmul.f32 %v580, %v577
        %v582 = vmul.f32 %v580, %v578
        %v583 = vadd.f32 %v581, 0.0
        %v584 = vadd.f32 %v582, 0.0
        %s585 = sld [smem:[#allocation5 + $0x1]]
        %v586 = vstv %s585
        %v587 = vmul.f32 %v586, %v577
        %v588 = vmul.f32 %v586, %v578
        %591 = vrot.lane.b32.xlu0 %v587, 127
        %v592 = vpop.permute.xlu0 %591
        %593 = vrot.lane.b32.xlu0 %v588, 127
        %v594 = vpop.permute.xlu0 %593
        %v597 = vadd.f32 %v583, %v592
        %v598 = vadd.f32 %v584, %v594
        %s599 = sld [smem:[#allocation5 + $0x2]]
        %v600 = vstv %s599
        %v601 = vmul.f32 %v600, %v577
        %v602 = vmul.f32 %v600, %v578
        %605 = vrot.lane.b32.xlu0 %v601, 126
        %v606 = vpop.permute.xlu0 %605
        %607 = vrot.lane.b32.xlu0 %v602, 126
        %v608 = vpop.permute.xlu0 %607
        %v611 = vadd.f32 %v597, %v606
        %v612 = vadd.f32 %v598, %v608
        %s613 = sld [smem:[#allocation5 + $0x3]]
        %v614 = vstv %s613
        %v615 = vmul.f32 %v614, %v577
        %v616 = vmul.f32 %v614, %v578
        %619 = vrot.lane.b32.xlu0 %v615, 125
        %v620 = vpop.permute.xlu0 %619
        %621 = vrot.lane.b32.xlu0 %v616, 125
        %v622 = vpop.permute.xlu0 %621
        %v625 = vadd.f32 %v611, %v620
        %v626 = vadd.f32 %v612, %v622
        %s627 = sld [smem:[#allocation5 + $0x4]]
        %v628 = vstv %s627
        %v629 = vmul.f32 %v628, %v577
        %v630 = vmul.f32 %v628, %v578
        %633 = vrot.lane.b32.xlu0 %v629, 124
        %v634 = vpop.permute.xlu0 %633
        %635 = vrot.lane.b32.xlu0 %v630, 124
        %v636 = vpop.permute.xlu0 %635
        %v639 = vadd.f32 %v625, %v634
        %v640 = vadd.f32 %v626, %v636
        %s641 = sld [smem:[#allocation5 + $0x5]]
        %v642 = vstv %s641
        %v643 = vmul.f32 %v642, %v577
        %v644 = vmul.f32 %v642, %v578
        %647 = vrot.lane.b32.xlu0 %v643, 123
        %v648 = vpop.permute.xlu0 %647
        %649 = vrot.lane.b32.xlu0 %v644, 123
        %v650 = vpop.permute.xlu0 %649
        %v653 = vadd.f32 %v639, %v648
        %v654 = vadd.f32 %v640, %v650
        %s655 = sld [smem:[#allocation5 + $0x6]]
        %v656 = vstv %s655
        %v657 = vmul.f32 %v656, %v577
        %v658 = vmul.f32 %v656, %v578
        %661 = vrot.lane.b32.xlu0 %v657, 122
        %v662 = vpop.permute.xlu0 %661
        %663 = vrot.lane.b32.xlu0 %v658, 122
        %v664 = vpop.permute.xlu0 %663
        %v667 = vadd.f32 %v653, %v662
        %v668 = vadd.f32 %v654, %v664
        %v669 = vld [vmem:[#allocation4 + $0x1] sm:$0xff]
        %v670 = vld [vmem:[#allocation4 + $0x9] sm:$0xff]
        %s671 = sld [smem:[#allocation5 + $0x7]]
        %v672 = vstv %s671
        %v673 = vmul.f32 %v672, %v669
        %v674 = vmul.f32 %v672, %v670
        %v675 = vadd.f32 %v667, %v673
        %v676 = vadd.f32 %v668, %v674
        %s677 = sld [smem:[#allocation5 + $0x8]]
        %v678 = vstv %s677
        %v679 = vmul.f32 %v678, %v669
        %v680 = vmul.f32 %v678, %v670
        %683 = vrot.lane.b32.xlu0 %v679, 127
        %v684 = vpop.permute.xlu0 %683
        %685 = vrot.lane.b32.xlu0 %v680, 127
        %v686 = vpop.permute.xlu0 %685
        %v689 = vadd.f32 %v675, %v684
        %v690 = vadd.f32 %v676, %v686
        %s691 = sld [smem:[#allocation5 + $0x9]]
        %v692 = vstv %s691
        %v693 = vmul.f32 %v692, %v669
        %v694 = vmul.f32 %v692, %v670
        %697 = vrot.lane.b32.xlu0 %v693, 126
        %v698 = vpop.permute.xlu0 %697
        %699 = vrot.lane.b32.xlu0 %v694, 126
        %v700 = vpop.permute.xlu0 %699
        %v703 = vadd.f32 %v689, %v698
        %v704 = vadd.f32 %v690, %v700
        %s705 = sld [smem:[#allocation5 + $0xa]]
        %v706 = vstv %s705
        %v707 = vmul.f32 %v706, %v669
        %v708 = vmul.f32 %v706, %v670
        %711 = vrot.lane.b32.xlu0 %v707, 125
        %v712 = vpop.permute.xlu0 %711
        %713 = vrot.lane.b32.xlu0 %v708, 125
        %v714 = vpop.permute.xlu0 %713
        %v717 = vadd.f32 %v703, %v712
        %v718 = vadd.f32 %v704, %v714
        %s719 = sld [smem:[#allocation5 + $0xb]]
        %v720 = vstv %s719
        %v721 = vmul.f32 %v720, %v669
        %v722 = vmul.f32 %v720, %v670
        %725 = vrot.lane.b32.xlu0 %v721, 124
        %v726 = vpop.permute.xlu0 %725
        %727 = vrot.lane.b32.xlu0 %v722, 124
        %v728 = vpop.permute.xlu0 %727
        %v731 = vadd.f32 %v717, %v726
        %v732 = vadd.f32 %v718, %v728
        %s733 = sld [smem:[#allocation5 + $0xc]]
        %v734 = vstv %s733
        %v735 = vmul.f32 %v734, %v669
        %v736 = vmul.f32 %v734, %v670
        %739 = vrot.lane.b32.xlu0 %v735, 123
        %v740 = vpop.permute.xlu0 %739
        %741 = vrot.lane.b32.xlu0 %v736, 123
        %v742 = vpop.permute.xlu0 %741
        %v745 = vadd.f32 %v731, %v740
        %v746 = vadd.f32 %v732, %v742
        %s747 = sld [smem:[#allocation5 + $0xd]]
        %v748 = vstv %s747
        %v749 = vmul.f32 %v748, %v669
        %v750 = vmul.f32 %v748, %v670
        %753 = vrot.lane.b32.xlu0 %v749, 122
        %v754 = vpop.permute.xlu0 %753
        %755 = vrot.lane.b32.xlu0 %v750, 122
        %v756 = vpop.permute.xlu0 %755
        %v759 = vadd.f32 %v745, %v754
        %v760 = vadd.f32 %v746, %v756
        %v761 = vld [vmem:[#allocation4 + $0x2] sm:$0xff]
        %v762 = vld [vmem:[#allocation4 + $0xa] sm:$0xff]
        %s763 = sld [smem:[#allocation5 + $0xe]]
        %v764 = vstv %s763
        %v765 = vmul.f32 %v764, %v761
        %v766 = vmul.f32 %v764, %v762
        %v767 = vadd.f32 %v759, %v765
        %v768 = vadd.f32 %v760, %v766
        %s769 = sld [smem:[#allocation5 + $0xf]]
        %v770 = vstv %s769
        %v771 = vmul.f32 %v770, %v761
        %v772 = vmul.f32 %v770, %v762
        %775 = vrot.lane.b32.xlu0 %v771, 127
        %v776 = vpop.permute.xlu0 %775
        %777 = vrot.lane.b32.xlu0 %v772, 127
        %v778 = vpop.permute.xlu0 %777
        %v781 = vadd.f32 %v767, %v776
        %v782 = vadd.f32 %v768, %v778
        %s783 = sld [smem:[#allocation5 + $0x10]]
        %v784 = vstv %s783
        %v785 = vmul.f32 %v784, %v761
        %v786 = vmul.f32 %v784, %v762
        %789 = vrot.lane.b32.xlu0 %v785, 126
        %v790 = vpop.permute.xlu0 %789
        %791 = vrot.lane.b32.xlu0 %v786, 126
        %v792 = vpop.permute.xlu0 %791
        %v795 = vadd.f32 %v781, %v790
        %v796 = vadd.f32 %v782, %v792
        %s797 = sld [smem:[#allocation5 + $0x11]]
        %v798 = vstv %s797
        %v799 = vmul.f32 %v798, %v761
        %v800 = vmul.f32 %v798, %v762
        %803 = vrot.lane.b32.xlu0 %v799, 125
        %v804 = vpop.permute.xlu0 %803
        %805 = vrot.lane.b32.xlu0 %v800, 125
        %v806 = vpop.permute.xlu0 %805
        %v809 = vadd.f32 %v795, %v804
        %v810 = vadd.f32 %v796, %v806
        %s811 = sld [smem:[#allocation5 + $0x12]]
        %v812 = vstv %s811
        %v813 = vmul.f32 %v812, %v761
        %v814 = vmul.f32 %v812, %v762
        %817 = vrot.lane.b32.xlu0 %v813, 124
        %v818 = vpop.permute.xlu0 %817
        %819 = vrot.lane.b32.xlu0 %v814, 124
        %v820 = vpop.permute.xlu0 %819
        %v823 = vadd.f32 %v809, %v818
        %v824 = vadd.f32 %v810, %v820
        %s825 = sld [smem:[#allocation5 + $0x13]]
        %v826 = vstv %s825
        %v827 = vmul.f32 %v826, %v761
        %v828 = vmul.f32 %v826, %v762
        %831 = vrot.lane.b32.xlu0 %v827, 123
        %v832 = vpop.permute.xlu0 %831
        %833 = vrot.lane.b32.xlu0 %v828, 123
        %v834 = vpop.permute.xlu0 %833
        %v837 = vadd.f32 %v823, %v832
        %v838 = vadd.f32 %v824, %v834
        %s839 = sld [smem:[#allocation5 + $0x14]]
        %v840 = vstv %s839
        %v841 = vmul.f32 %v840, %v761
        %v842 = vmul.f32 %v840, %v762
        %845 = vrot.lane.b32.xlu0 %v841, 122
        %v846 = vpop.permute.xlu0 %845
        %847 = vrot.lane.b32.xlu0 %v842, 122
        %v848 = vpop.permute.xlu0 %847
        %v851 = vadd.f32 %v837, %v846
        %v852 = vadd.f32 %v838, %v848
        %v853 = vld [vmem:[#allocation4 + $0x3] sm:$0xff]
        %v854 = vld [vmem:[#allocation4 + $0xb] sm:$0xff]
        %s855 = sld [smem:[#allocation5 + $0x15]]
        %v856 = vstv %s855
        %v857 = vmul.f32 %v856, %v853
        %v858 = vmul.f32 %v856, %v854
        %v859 = vadd.f32 %v851, %v857
        %v860 = vadd.f32 %v852, %v858
        %s861 = sld [smem:[#allocation5 + $0x16]]
        %v862 = vstv %s861
        %v863 = vmul.f32 %v862, %v853
        %v864 = vmul.f32 %v862, %v854
        %867 = vrot.lane.b32.xlu0 %v863, 127
        %v868 = vpop.permute.xlu0 %867
        %869 = vrot.lane.b32.xlu0 %v864, 127
        %v870 = vpop.permute.xlu0 %869
        %v873 = vadd.f32 %v859, %v868
        %v874 = vadd.f32 %v860, %v870
        %s875 = sld [smem:[#allocation5 + $0x17]]
        %v876 = vstv %s875
        %v877 = vmul.f32 %v876, %v853
        %v878 = vmul.f32 %v876, %v854
        %881 = vrot.lane.b32.xlu0 %v877, 126
        %v882 = vpop.permute.xlu0 %881
        %883 = vrot.lane.b32.xlu0 %v878, 126
        %v884 = vpop.permute.xlu0 %883
        %v887 = vadd.f32 %v873, %v882
        %v888 = vadd.f32 %v874, %v884
        %s889 = sld [smem:[#allocation5 + $0x18]]
        %v890 = vstv %s889
        %v891 = vmul.f32 %v890, %v853
        %v892 = vmul.f32 %v890, %v854
        %895 = vrot.lane.b32.xlu0 %v891, 125
        %v896 = vpop.permute.xlu0 %895
        %897 = vrot.lane.b32.xlu0 %v892, 125
        %v898 = vpop.permute.xlu0 %897
        %v901 = vadd.f32 %v887, %v896
        %v902 = vadd.f32 %v888, %v898
        %s903 = sld [smem:[#allocation5 + $0x19]]
        %v904 = vstv %s903
        %v905 = vmul.f32 %v904, %v853
        %v906 = vmul.f32 %v904, %v854
        %909 = vrot.lane.b32.xlu0 %v905, 124
        %v910 = vpop.permute.xlu0 %909
        %911 = vrot.lane.b32.xlu0 %v906, 124
        %v912 = vpop.permute.xlu0 %911
        %v915 = vadd.f32 %v901, %v910
        %v916 = vadd.f32 %v902, %v912
        %s917 = sld [smem:[#allocation5 + $0x1a]]
        %v918 = vstv %s917
        %v919 = vmul.f32 %v918, %v853
        %v920 = vmul.f32 %v918, %v854
        %923 = vrot.lane.b32.xlu0 %v919, 123
        %v924 = vpop.permute.xlu0 %923
        %925 = vrot.lane.b32.xlu0 %v920, 123
        %v926 = vpop.permute.xlu0 %925
        %v929 = vadd.f32 %v915, %v924
        %v930 = vadd.f32 %v916, %v926
        %s931 = sld [smem:[#allocation5 + $0x1b]]
        %v932 = vstv %s931
        %v933 = vmul.f32 %v932, %v853
        %v934 = vmul.f32 %v932, %v854
        %937 = vrot.lane.b32.xlu0 %v933, 122
        %v938 = vpop.permute.xlu0 %937
        %939 = vrot.lane.b32.xlu0 %v934, 122
        %v940 = vpop.permute.xlu0 %939
        %v943 = vadd.f32 %v929, %v938
        %v944 = vadd.f32 %v930, %v940
        %v945 = vld [vmem:[#allocation4 + $0x4] sm:$0xff]
        %v946 = vld [vmem:[#allocation4 + $0xc] sm:$0xff]
        %s947 = sld [smem:[#allocation5 + $0x1c]]
        %v948 = vstv %s947
        %v949 = vmul.f32 %v948, %v945
        %v950 = vmul.f32 %v948, %v946
        %v951 = vadd.f32 %v943, %v949
        %v952 = vadd.f32 %v944, %v950
        %s953 = sld [smem:[#allocation5 + $0x1d]]
        %v954 = vstv %s953
        %v955 = vmul.f32 %v954, %v945
        %v956 = vmul.f32 %v954, %v946
        %959 = vrot.lane.b32.xlu0 %v955, 127
        %v960 = vpop.permute.xlu0 %959
        %961 = vrot.lane.b32.xlu0 %v956, 127
        %v962 = vpop.permute.xlu0 %961
        %v965 = vadd.f32 %v951, %v960
        %v966 = vadd.f32 %v952, %v962
        %s967 = sld [smem:[#allocation5 + $0x1e]]
        %v968 = vstv %s967
        %v969 = vmul.f32 %v968, %v945
        %v970 = vmul.f32 %v968, %v946
        %973 = vrot.lane.b32.xlu0 %v969, 126
        %v974 = vpop.permute.xlu0 %973
        %975 = vrot.lane.b32.xlu0 %v970, 126
        %v976 = vpop.permute.xlu0 %975
        %v979 = vadd.f32 %v965, %v974
        %v980 = vadd.f32 %v966, %v976
        %s981 = sld [smem:[#allocation5 + $0x1f]]
        %v982 = vstv %s981
        %v983 = vmul.f32 %v982, %v945
        %v984 = vmul.f32 %v982, %v946
        %987 = vrot.lane.b32.xlu0 %v983, 125
        %v988 = vpop.permute.xlu0 %987
        %989 = vrot.lane.b32.xlu0 %v984, 125
        %v990 = vpop.permute.xlu0 %989
        %v993 = vadd.f32 %v979, %v988
        %v994 = vadd.f32 %v980, %v990
        %s995 = sld [smem:[#allocation5 + $0x20]]
        %v996 = vstv %s995
        %v997 = vmul.f32 %v996, %v945
        %v998 = vmul.f32 %v996, %v946
        %1001 = vrot.lane.b32.xlu0 %v997, 124
        %v1002 = vpop.permute.xlu0 %1001
        %1003 = vrot.lane.b32.xlu0 %v998, 124
        %v1004 = vpop.permute.xlu0 %1003
        %v1007 = vadd.f32 %v993, %v1002
        %v1008 = vadd.f32 %v994, %v1004
        %s1009 = sld [smem:[#allocation5 + $0x21]]
        %v1010 = vstv %s1009
        %v1011 = vmul.f32 %v1010, %v945
        %v1012 = vmul.f32 %v1010, %v946
        %1015 = vrot.lane.b32.xlu0 %v1011, 123
        %v1016 = vpop.permute.xlu0 %1015
        %1017 = vrot.lane.b32.xlu0 %v1012, 123
        %v1018 = vpop.permute.xlu0 %1017
        %v1021 = vadd.f32 %v1007, %v1016
        %v1022 = vadd.f32 %v1008, %v1018
        %s1023 = sld [smem:[#allocation5 + $0x22]]
        %v1024 = vstv %s1023
        %v1025 = vmul.f32 %v1024, %v945
        %v1026 = vmul.f32 %v1024, %v946
        %1029 = vrot.lane.b32.xlu0 %v1025, 122
        %v1030 = vpop.permute.xlu0 %1029
        %1031 = vrot.lane.b32.xlu0 %v1026, 122
        %v1032 = vpop.permute.xlu0 %1031
        %v1035 = vadd.f32 %v1021, %v1030
        %v1036 = vadd.f32 %v1022, %v1032
        %v1037 = vld [vmem:[#allocation4 + $0x5] sm:$0xff]
        %v1038 = vld [vmem:[#allocation4 + $0xd] sm:$0xff]
        %s1039 = sld [smem:[#allocation5 + $0x23]]
        %v1040 = vstv %s1039
        %v1041 = vmul.f32 %v1040, %v1037
        %v1042 = vmul.f32 %v1040, %v1038
        %v1043 = vadd.f32 %v1035, %v1041
        %v1044 = vadd.f32 %v1036, %v1042
        %s1045 = sld [smem:[#allocation5 + $0x24]]
        %v1046 = vstv %s1045
        %v1047 = vmul.f32 %v1046, %v1037
        %v1048 = vmul.f32 %v1046, %v1038
        %1051 = vrot.lane.b32.xlu0 %v1047, 127
        %v1052 = vpop.permute.xlu0 %1051
        %1053 = vrot.lane.b32.xlu0 %v1048, 127
        %v1054 = vpop.permute.xlu0 %1053
        %v1057 = vadd.f32 %v1043, %v1052
        %v1058 = vadd.f32 %v1044, %v1054
        %s1059 = sld [smem:[#allocation5 + $0x25]]
        %v1060 = vstv %s1059
        %v1061 = vmul.f32 %v1060, %v1037
        %v1062 = vmul.f32 %v1060, %v1038
        %1065 = vrot.lane.b32.xlu0 %v1061, 126
        %v1066 = vpop.permute.xlu0 %1065
        %1067 = vrot.lane.b32.xlu0 %v1062, 126
        %v1068 = vpop.permute.xlu0 %1067
        %v1071 = vadd.f32 %v1057, %v1066
        %v1072 = vadd.f32 %v1058, %v1068
        %s1073 = sld [smem:[#allocation5 + $0x26]]
        %v1074 = vstv %s1073
        %v1075 = vmul.f32 %v1074, %v1037
        %v1076 = vmul.f32 %v1074, %v1038
        %1079 = vrot.lane.b32.xlu0 %v1075, 125
        %v1080 = vpop.permute.xlu0 %1079
        %1081 = vrot.lane.b32.xlu0 %v1076, 125
        %v1082 = vpop.permute.xlu0 %1081
        %v1085 = vadd.f32 %v1071, %v1080
        %v1086 = vadd.f32 %v1072, %v1082
        %s1087 = sld [smem:[#allocation5 + $0x27]]
        %v1088 = vstv %s1087
        %v1089 = vmul.f32 %v1088, %v1037
        %v1090 = vmul.f32 %v1088, %v1038
        %1093 = vrot.lane.b32.xlu0 %v1089, 124
        %v1094 = vpop.permute.xlu0 %1093
        %1095 = vrot.lane.b32.xlu0 %v1090, 124
        %v1096 = vpop.permute.xlu0 %1095
        %v1099 = vadd.f32 %v1085, %v1094
        %v1100 = vadd.f32 %v1086, %v1096
        %s1101 = sld [smem:[#allocation5 + $0x28]]
        %v1102 = vstv %s1101
        %v1103 = vmul.f32 %v1102, %v1037
        %v1104 = vmul.f32 %v1102, %v1038
        %1107 = vrot.lane.b32.xlu0 %v1103, 123
        %v1108 = vpop.permute.xlu0 %1107
        %1109 = vrot.lane.b32.xlu0 %v1104, 123
        %v1110 = vpop.permute.xlu0 %1109
        %v1113 = vadd.f32 %v1099, %v1108
        %v1114 = vadd.f32 %v1100, %v1110
        %s1115 = sld [smem:[#allocation5 + $0x29]]
        %v1116 = vstv %s1115
        %v1117 = vmul.f32 %v1116, %v1037
        %v1118 = vmul.f32 %v1116, %v1038
        %1121 = vrot.lane.b32.xlu0 %v1117, 122
        %v1122 = vpop.permute.xlu0 %1121
        %1123 = vrot.lane.b32.xlu0 %v1118, 122
        %v1124 = vpop.permute.xlu0 %1123
        %v1127 = vadd.f32 %v1113, %v1122
        %v1128 = vadd.f32 %v1114, %v1124
        %v1129 = vld [vmem:[#allocation4 + $0x6] sm:$0xff]
        %v1130 = vld [vmem:[#allocation4 + $0xe] sm:$0xff]
        %s1131 = sld [smem:[#allocation5 + $0x2a]]
        %v1132 = vstv %s1131
        %v1133 = vmul.f32 %v1132, %v1129
        %v1134 = vmul.f32 %v1132, %v1130
        %v1135 = vadd.f32 %v1127, %v1133
        %v1136 = vadd.f32 %v1128, %v1134
        %s1137 = sld [smem:[#allocation5 + $0x2b]]
        %v1138 = vstv %s1137
        %v1139 = vmul.f32 %v1138, %v1129
        %v1140 = vmul.f32 %v1138, %v1130
        %1143 = vrot.lane.b32.xlu0 %v1139, 127
        %v1144 = vpop.permute.xlu0 %1143
        %1145 = vrot.lane.b32.xlu0 %v1140, 127
        %v1146 = vpop.permute.xlu0 %1145
        %v1149 = vadd.f32 %v1135, %v1144
        %v1150 = vadd.f32 %v1136, %v1146
        %s1151 = sld [smem:[#allocation5 + $0x2c]]
        %v1152 = vstv %s1151
        %v1153 = vmul.f32 %v1152, %v1129
        %v1154 = vmul.f32 %v1152, %v1130
        %1157 = vrot.lane.b32.xlu0 %v1153, 126
        %v1158 = vpop.permute.xlu0 %1157
        %1159 = vrot.lane.b32.xlu0 %v1154, 126
        %v1160 = vpop.permute.xlu0 %1159
        %v1163 = vadd.f32 %v1149, %v1158
        %v1164 = vadd.f32 %v1150, %v1160
        %s1165 = sld [smem:[#allocation5 + $0x2d]]
        %v1166 = vstv %s1165
        %v1167 = vmul.f32 %v1166, %v1129
        %v1168 = vmul.f32 %v1166, %v1130
        %1171 = vrot.lane.b32.xlu0 %v1167, 125
        %v1172 = vpop.permute.xlu0 %1171
        %1173 = vrot.lane.b32.xlu0 %v1168, 125
        %v1174 = vpop.permute.xlu0 %1173
        %v1177 = vadd.f32 %v1163, %v1172
        %v1178 = vadd.f32 %v1164, %v1174
        %s1179 = sld [smem:[#allocation5 + $0x2e]]
        %v1180 = vstv %s1179
        %v1181 = vmul.f32 %v1180, %v1129
        %v1182 = vmul.f32 %v1180, %v1130
        %1185 = vrot.lane.b32.xlu0 %v1181, 124
        %v1186 = vpop.permute.xlu0 %1185
        %1187 = vrot.lane.b32.xlu0 %v1182, 124
        %v1188 = vpop.permute.xlu0 %1187
        %v1191 = vadd.f32 %v1177, %v1186
        %v1192 = vadd.f32 %v1178, %v1188
        %s1193 = sld [smem:[#allocation5 + $0x2f]]
        %v1194 = vstv %s1193
        %v1195 = vmul.f32 %v1194, %v1129
        %v1196 = vmul.f32 %v1194, %v1130
        %1199 = vrot.lane.b32.xlu0 %v1195, 123
        %v1200 = vpop.permute.xlu0 %1199
        %1201 = vrot.lane.b32.xlu0 %v1196, 123
        %v1202 = vpop.permute.xlu0 %1201
        %v1205 = vadd.f32 %v1191, %v1200
        %v1206 = vadd.f32 %v1192, %v1202
        %s1207 = sld [smem:[#allocation5 + $0x30]]
        %v1208 = vstv %s1207
        %v1209 = vmul.f32 %v1208, %v1129
        %v1210 = vmul.f32 %v1208, %v1130
        %1213 = vrot.lane.b32.xlu0 %v1209, 122
        %v1214 = vpop.permute.xlu0 %1213
        %1215 = vrot.lane.b32.xlu0 %v1210, 122
        %v1216 = vpop.permute.xlu0 %1215
        %v1219 = vadd.f32 %v1205, %v1214
        %v1220 = vadd.f32 %v1206, %v1216
        %v1221 = vld [vmem:[%s425] sm:$0xff]
        %v1222 = vld [vmem:[%s425 + $0x8] sm:$0xff]
        %s1223 = sld [smem:[#allocation5 + $0x31]]
        %v1224 = vstv %s1223
        %v1225 = vmul.f32 %v1224, %v1221
        %v1226 = vmul.f32 %v1224, %v1222
        %v1227 = vadd.f32 %v1219, %v1225
        %v1228 = vadd.f32 %v1220, %v1226
        %s1229 = sld [smem:[#allocation5 + $0x32]]
        %v1230 = vstv %s1229
        %v1231 = vmul.f32 %v1230, %v1221
        %v1232 = vmul.f32 %v1230, %v1222
        %1235 = vrot.lane.b32.xlu0 %v1231, 127
        %v1236 = vpop.permute.xlu0 %1235
        %1237 = vrot.lane.b32.xlu0 %v1232, 127
        %v1238 = vpop.permute.xlu0 %1237
        %v1241 = vadd.f32 %v1227, %v1236
        %v1242 = vadd.f32 %v1228, %v1238
        %s1243 = sld [smem:[#allocation5 + $0x33]]
        %v1244 = vstv %s1243
        %v1245 = vmul.f32 %v1244, %v1221
        %v1246 = vmul.f32 %v1244, %v1222
        %1249 = vrot.lane.b32.xlu0 %v1245, 126
        %v1250 = vpop.permute.xlu0 %1249
        %1251 = vrot.lane.b32.xlu0 %v1246, 126
        %v1252 = vpop.permute.xlu0 %1251
        %v1255 = vadd.f32 %v1241, %v1250
        %v1256 = vadd.f32 %v1242, %v1252
        %s1257 = sld [smem:[#allocation5 + $0x34]]
        %v1258 = vstv %s1257
        %v1259 = vmul.f32 %v1258, %v1221
        %v1260 = vmul.f32 %v1258, %v1222
        %1263 = vrot.lane.b32.xlu0 %v1259, 125
        %v1264 = vpop.permute.xlu0 %1263
        %1265 = vrot.lane.b32.xlu0 %v1260, 125
        %v1266 = vpop.permute.xlu0 %1265
        %v1269 = vadd.f32 %v1255, %v1264
        %v1270 = vadd.f32 %v1256, %v1266
        %s1271 = sld [smem:[#allocation5 + $0x35]]
        %v1272 = vstv %s1271
        %v1273 = vmul.f32 %v1272, %v1221
        %v1274 = vmul.f32 %v1272, %v1222
        %1277 = vrot.lane.b32.xlu0 %v1273, 124
        %v1278 = vpop.permute.xlu0 %1277
        %1279 = vrot.lane.b32.xlu0 %v1274, 124
        %v1280 = vpop.permute.xlu0 %1279
        %v1283 = vadd.f32 %v1269, %v1278
        %v1284 = vadd.f32 %v1270, %v1280
        %s1285 = sld [smem:[#allocation5 + $0x36]]
        %v1286 = vstv %s1285
        %v1287 = vmul.f32 %v1286, %v1221
        %v1288 = vmul.f32 %v1286, %v1222
        %1291 = vrot.lane.b32.xlu0 %v1287, 123
        %v1292 = vpop.permute.xlu0 %1291
        %1293 = vrot.lane.b32.xlu0 %v1288, 123
        %v1294 = vpop.permute.xlu0 %1293
        %v1297 = vadd.f32 %v1283, %v1292
        %v1298 = vadd.f32 %v1284, %v1294
        %s1299 = sld [smem:[#allocation5 + $0x37]]
        %v1300 = vstv %s1299
        %v1301 = vmul.f32 %v1300, %v1221
        %v1302 = vmul.f32 %v1300, %v1222
        %1305 = vrot.lane.b32.xlu0 %v1301, 122
        %v1306 = vpop.permute.xlu0 %1305
        %1307 = vrot.lane.b32.xlu0 %v1302, 122
        %v1308 = vpop.permute.xlu0 %1307
        %v1311 = vadd.f32 %v1297, %v1306
        %v1312 = vadd.f32 %v1298, %v1308
        %v1313 = vld [vmem:[%s425 + $0x1] sm:$0xff]
        %v1314 = vld [vmem:[%s425 + $0x9] sm:$0xff]
        %s1315 = sld [smem:[#allocation5 + $0x38]]
        %v1316 = vstv %s1315
        %v1317 = vmul.f32 %v1316, %v1313
        %v1318 = vmul.f32 %v1316, %v1314
        %v1319 = vadd.f32 %v1311, %v1317
        %v1320 = vadd.f32 %v1312, %v1318
        %s1321 = sld [smem:[#allocation5 + $0x39]]
        %v1322 = vstv %s1321
        %v1323 = vmul.f32 %v1322, %v1313
        %v1324 = vmul.f32 %v1322, %v1314
        %1327 = vrot.lane.b32.xlu0 %v1323, 127
        %v1328 = vpop.permute.xlu0 %1327
        %1329 = vrot.lane.b32.xlu0 %v1324, 127
        %v1330 = vpop.permute.xlu0 %1329
        %v1333 = vadd.f32 %v1319, %v1328
        %v1334 = vadd.f32 %v1320, %v1330
        %s1335 = sld [smem:[#allocation5 + $0x3a]]
        %v1336 = vstv %s1335
        %v1337 = vmul.f32 %v1336, %v1313
        %v1338 = vmul.f32 %v1336, %v1314
        %1341 = vrot.lane.b32.xlu0 %v1337, 126
        %v1342 = vpop.permute.xlu0 %1341
        %1343 = vrot.lane.b32.xlu0 %v1338, 126
        %v1344 = vpop.permute.xlu0 %1343
        %v1347 = vadd.f32 %v1333, %v1342
        %v1348 = vadd.f32 %v1334, %v1344
        %s1349 = sld [smem:[#allocation5 + $0x3b]]
        %v1350 = vstv %s1349
        %v1351 = vmul.f32 %v1350, %v1313
        %v1352 = vmul.f32 %v1350, %v1314
        %1355 = vrot.lane.b32.xlu0 %v1351, 125
        %v1356 = vpop.permute.xlu0 %1355
        %1357 = vrot.lane.b32.xlu0 %v1352, 125
        %v1358 = vpop.permute.xlu0 %1357
        %v1361 = vadd.f32 %v1347, %v1356
        %v1362 = vadd.f32 %v1348, %v1358
        %s1363 = sld [smem:[#allocation5 + $0x3c]]
        %v1364 = vstv %s1363
        %v1365 = vmul.f32 %v1364, %v1313
        %v1366 = vmul.f32 %v1364, %v1314
        %1369 = vrot.lane.b32.xlu0 %v1365, 124
        %v1370 = vpop.permute.xlu0 %1369
        %1371 = vrot.lane.b32.xlu0 %v1366, 124
        %v1372 = vpop.permute.xlu0 %1371
        %v1375 = vadd.f32 %v1361, %v1370
        %v1376 = vadd.f32 %v1362, %v1372
        %s1377 = sld [smem:[#allocation5 + $0x3d]]
        %v1378 = vstv %s1377
        %v1379 = vmul.f32 %v1378, %v1313
        %v1380 = vmul.f32 %v1378, %v1314
        %1383 = vrot.lane.b32.xlu0 %v1379, 123
        %v1384 = vpop.permute.xlu0 %1383
        %1385 = vrot.lane.b32.xlu0 %v1380, 123
        %v1386 = vpop.permute.xlu0 %1385
        %v1389 = vadd.f32 %v1375, %v1384
        %v1390 = vadd.f32 %v1376, %v1386
        %s1391 = sld [smem:[#allocation5 + $0x3e]]
        %v1392 = vstv %s1391
        %v1393 = vmul.f32 %v1392, %v1313
        %v1394 = vmul.f32 %v1392, %v1314
        %1397 = vrot.lane.b32.xlu0 %v1393, 122
        %v1398 = vpop.permute.xlu0 %1397
        %1399 = vrot.lane.b32.xlu0 %v1394, 122
        %v1400 = vpop.permute.xlu0 %1399
        %v1403 = vadd.f32 %v1389, %v1398
        %v1404 = vadd.f32 %v1390, %v1400
        %v1405 = vld [vmem:[%s425 + $0x2] sm:$0xff]
        %v1406 = vld [vmem:[%s425 + $0xa] sm:$0xff]
        %s1407 = sld [smem:[#allocation5 + $0x3f]]
        %v1408 = vstv %s1407
        %v1409 = vmul.f32 %v1408, %v1405
        %v1410 = vmul.f32 %v1408, %v1406
        %v1411 = vadd.f32 %v1403, %v1409
        %v1412 = vadd.f32 %v1404, %v1410
        %s1413 = sld [smem:[#allocation5 + $0x40]]
        %v1414 = vstv %s1413
        %v1415 = vmul.f32 %v1414, %v1405
        %v1416 = vmul.f32 %v1414, %v1406
        %1419 = vrot.lane.b32.xlu0 %v1415, 127
        %v1420 = vpop.permute.xlu0 %1419
        %1421 = vrot.lane.b32.xlu0 %v1416, 127
        %v1422 = vpop.permute.xlu0 %1421
        %v1425 = vadd.f32 %v1411, %v1420
        %v1426 = vadd.f32 %v1412, %v1422
        %s1427 = sld [smem:[#allocation5 + $0x41]]
        %v1428 = vstv %s1427
        %v1429 = vmul.f32 %v1428, %v1405
        %v1430 = vmul.f32 %v1428, %v1406
        %1433 = vrot.lane.b32.xlu0 %v1429, 126
        %v1434 = vpop.permute.xlu0 %1433
        %1435 = vrot.lane.b32.xlu0 %v1430, 126
        %v1436 = vpop.permute.xlu0 %1435
        %v1439 = vadd.f32 %v1425, %v1434
        %v1440 = vadd.f32 %v1426, %v1436
        %s1441 = sld [smem:[#allocation5 + $0x42]]
        %v1442 = vstv %s1441
        %v1443 = vmul.f32 %v1442, %v1405
        %v1444 = vmul.f32 %v1442, %v1406
        %1447 = vrot.lane.b32.xlu0 %v1443, 125
        %v1448 = vpop.permute.xlu0 %1447
        %1449 = vrot.lane.b32.xlu0 %v1444, 125
        %v1450 = vpop.permute.xlu0 %1449
        %v1453 = vadd.f32 %v1439, %v1448
        %v1454 = vadd.f32 %v1440, %v1450
        %s1455 = sld [smem:[#allocation5 + $0x43]]
        %v1456 = vstv %s1455
        %v1457 = vmul.f32 %v1456, %v1405
        %v1458 = vmul.f32 %v1456, %v1406
        %1461 = vrot.lane.b32.xlu0 %v1457, 124
        %v1462 = vpop.permute.xlu0 %1461
        %1463 = vrot.lane.b32.xlu0 %v1458, 124
        %v1464 = vpop.permute.xlu0 %1463
        %v1467 = vadd.f32 %v1453, %v1462
        %v1468 = vadd.f32 %v1454, %v1464
        %s1469 = sld [smem:[#allocation5 + $0x44]]
        %v1470 = vstv %s1469
        %v1471 = vmul.f32 %v1470, %v1405
        %v1472 = vmul.f32 %v1470, %v1406
        %1475 = vrot.lane.b32.xlu0 %v1471, 123
        %v1476 = vpop.permute.xlu0 %1475
        %1477 = vrot.lane.b32.xlu0 %v1472, 123
        %v1478 = vpop.permute.xlu0 %1477
        %v1481 = vadd.f32 %v1467, %v1476
        %v1482 = vadd.f32 %v1468, %v1478
        %s1483 = sld [smem:[#allocation5 + $0x45]]
        %v1484 = vstv %s1483
        %v1485 = vmul.f32 %v1484, %v1405
        %v1486 = vmul.f32 %v1484, %v1406
        %1489 = vrot.lane.b32.xlu0 %v1485, 122
        %v1490 = vpop.permute.xlu0 %1489
        %1491 = vrot.lane.b32.xlu0 %v1486, 122
        %v1492 = vpop.permute.xlu0 %1491
        %v1495 = vadd.f32 %v1481, %v1490
        %v1496 = vadd.f32 %v1482, %v1492
        %v1497 = vld [vmem:[%s425 + $0x3] sm:$0xff]
        %v1498 = vld [vmem:[%s425 + $0xb] sm:$0xff]
        %s1499 = sld [smem:[#allocation5 + $0x46]]
        %v1500 = vstv %s1499
        %v1501 = vmul.f32 %v1500, %v1497
        %v1502 = vmul.f32 %v1500, %v1498
        %v1503 = vadd.f32 %v1495, %v1501
        %v1504 = vadd.f32 %v1496, %v1502
        %s1505 = sld [smem:[#allocation5 + $0x47]]
        %v1506 = vstv %s1505
        %v1507 = vmul.f32 %v1506, %v1497
        %v1508 = vmul.f32 %v1506, %v1498
        %1511 = vrot.lane.b32.xlu0 %v1507, 127
        %v1512 = vpop.permute.xlu0 %1511
        %1513 = vrot.lane.b32.xlu0 %v1508, 127
        %v1514 = vpop.permute.xlu0 %1513
        %v1517 = vadd.f32 %v1503, %v1512
        %v1518 = vadd.f32 %v1504, %v1514
        %s1519 = sld [smem:[#allocation5 + $0x48]]
        %v1520 = vstv %s1519
        %v1521 = vmul.f32 %v1520, %v1497
        %v1522 = vmul.f32 %v1520, %v1498
        %1525 = vrot.lane.b32.xlu0 %v1521, 126
        %v1526 = vpop.permute.xlu0 %1525
        %1527 = vrot.lane.b32.xlu0 %v1522, 126
        %v1528 = vpop.permute.xlu0 %1527
        %v1531 = vadd.f32 %v1517, %v1526
        %v1532 = vadd.f32 %v1518, %v1528
        %s1533 = sld [smem:[#allocation5 + $0x49]]
        %v1534 = vstv %s1533
        %v1535 = vmul.f32 %v1534, %v1497
        %v1536 = vmul.f32 %v1534, %v1498
        %1539 = vrot.lane.b32.xlu0 %v1535, 125
        %v1540 = vpop.permute.xlu0 %1539
        %1541 = vrot.lane.b32.xlu0 %v1536, 125
        %v1542 = vpop.permute.xlu0 %1541
        %v1545 = vadd.f32 %v1531, %v1540
        %v1546 = vadd.f32 %v1532, %v1542
        %s1547 = sld [smem:[#allocation5 + $0x4a]]
        %v1548 = vstv %s1547
        %v1549 = vmul.f32 %v1548, %v1497
        %v1550 = vmul.f32 %v1548, %v1498
        %1553 = vrot.lane.b32.xlu0 %v1549, 124
        %v1554 = vpop.permute.xlu0 %1553
        %1555 = vrot.lane.b32.xlu0 %v1550, 124
        %v1556 = vpop.permute.xlu0 %1555
        %v1559 = vadd.f32 %v1545, %v1554
        %v1560 = vadd.f32 %v1546, %v1556
        %s1561 = sld [smem:[#allocation5 + $0x4b]]
        %v1562 = vstv %s1561
        %v1563 = vmul.f32 %v1562, %v1497
        %v1564 = vmul.f32 %v1562, %v1498
        %1567 = vrot.lane.b32.xlu0 %v1563, 123
        %v1568 = vpop.permute.xlu0 %1567
        %1569 = vrot.lane.b32.xlu0 %v1564, 123
        %v1570 = vpop.permute.xlu0 %1569
        %v1573 = vadd.f32 %v1559, %v1568
        %v1574 = vadd.f32 %v1560, %v1570
        %s1575 = sld [smem:[#allocation5 + $0x4c]]
        %v1576 = vstv %s1575
        %v1577 = vmul.f32 %v1576, %v1497
        %v1578 = vmul.f32 %v1576, %v1498
        %1581 = vrot.lane.b32.xlu0 %v1577, 122
        %v1582 = vpop.permute.xlu0 %1581
        %1583 = vrot.lane.b32.xlu0 %v1578, 122
        %v1584 = vpop.permute.xlu0 %1583
        %v1587 = vadd.f32 %v1573, %v1582
        %v1588 = vadd.f32 %v1574, %v1584
        %v1589 = vld [vmem:[%s425 + $0x4] sm:$0xff]
        %v1590 = vld [vmem:[%s425 + $0xc] sm:$0xff]
        %s1591 = sld [smem:[#allocation5 + $0x4d]]
        %v1592 = vstv %s1591
        %v1593 = vmul.f32 %v1592, %v1589
        %v1594 = vmul.f32 %v1592, %v1590
        %v1595 = vadd.f32 %v1587, %v1593
        %v1596 = vadd.f32 %v1588, %v1594
        %s1597 = sld [smem:[#allocation5 + $0x4e]]
        %v1598 = vstv %s1597
        %v1599 = vmul.f32 %v1598, %v1589
        %v1600 = vmul.f32 %v1598, %v1590
        %1603 = vrot.lane.b32.xlu0 %v1599, 127
        %v1604 = vpop.permute.xlu0 %1603
        %1605 = vrot.lane.b32.xlu0 %v1600, 127
        %v1606 = vpop.permute.xlu0 %1605
        %v1609 = vadd.f32 %v1595, %v1604
        %v1610 = vadd.f32 %v1596, %v1606
        %s1611 = sld [smem:[#allocation5 + $0x4f]]
        %v1612 = vstv %s1611
        %v1613 = vmul.f32 %v1612, %v1589
        %v1614 = vmul.f32 %v1612, %v1590
        %1617 = vrot.lane.b32.xlu0 %v1613, 126
        %v1618 = vpop.permute.xlu0 %1617
        %1619 = vrot.lane.b32.xlu0 %v1614, 126
        %v1620 = vpop.permute.xlu0 %1619
        %v1623 = vadd.f32 %v1609, %v1618
        %v1624 = vadd.f32 %v1610, %v1620
        %s1625 = sld [smem:[#allocation5 + $0x50]]
        %v1626 = vstv %s1625
        %v1627 = vmul.f32 %v1626, %v1589
        %v1628 = vmul.f32 %v1626, %v1590
        %1631 = vrot.lane.b32.xlu0 %v1627, 125
        %v1632 = vpop.permute.xlu0 %1631
        %1633 = vrot.lane.b32.xlu0 %v1628, 125
        %v1634 = vpop.permute.xlu0 %1633
        %v1637 = vadd.f32 %v1623, %v1632
        %v1638 = vadd.f32 %v1624, %v1634
        %s1639 = sld [smem:[#allocation5 + $0x51]]
        %v1640 = vstv %s1639
        %v1641 = vmul.f32 %v1640, %v1589
        %v1642 = vmul.f32 %v1640, %v1590
        %1645 = vrot.lane.b32.xlu0 %v1641, 124
        %v1646 = vpop.permute.xlu0 %1645
        %1647 = vrot.lane.b32.xlu0 %v1642, 124
        %v1648 = vpop.permute.xlu0 %1647
        %v1651 = vadd.f32 %v1637, %v1646
        %v1652 = vadd.f32 %v1638, %v1648
        %s1653 = sld [smem:[#allocation5 + $0x52]]
        %v1654 = vstv %s1653
        %v1655 = vmul.f32 %v1654, %v1589
        %v1656 = vmul.f32 %v1654, %v1590
        %1659 = vrot.lane.b32.xlu0 %v1655, 123
        %v1660 = vpop.permute.xlu0 %1659
        %1661 = vrot.lane.b32.xlu0 %v1656, 123
        %v1662 = vpop.permute.xlu0 %1661
        %v1665 = vadd.f32 %v1651, %v1660
        %v1666 = vadd.f32 %v1652, %v1662
        %s1667 = sld [smem:[#allocation5 + $0x53]]
        %v1668 = vstv %s1667
        %v1669 = vmul.f32 %v1668, %v1589
        %v1670 = vmul.f32 %v1668, %v1590
        %1673 = vrot.lane.b32.xlu0 %v1669, 122
        %v1674 = vpop.permute.xlu0 %1673
        %1675 = vrot.lane.b32.xlu0 %v1670, 122
        %v1676 = vpop.permute.xlu0 %1675
        %v1679 = vadd.f32 %v1665, %v1674
        %v1680 = vadd.f32 %v1666, %v1676
        %v1681 = vld [vmem:[%s425 + $0x5] sm:$0xff]
        %v1682 = vld [vmem:[%s425 + $0xd] sm:$0xff]
        %s1683 = sld [smem:[#allocation5 + $0x54]]
        %v1684 = vstv %s1683
        %v1685 = vmul.f32 %v1684, %v1681
        %v1686 = vmul.f32 %v1684, %v1682
        %v1687 = vadd.f32 %v1679, %v1685
        %v1688 = vadd.f32 %v1680, %v1686
        %s1689 = sld [smem:[#allocation5 + $0x55]]
        %v1690 = vstv %s1689
        %v1691 = vmul.f32 %v1690, %v1681
        %v1692 = vmul.f32 %v1690, %v1682
        %1695 = vrot.lane.b32.xlu0 %v1691, 127
        %v1696 = vpop.permute.xlu0 %1695
        %1697 = vrot.lane.b32.xlu0 %v1692, 127
        %v1698 = vpop.permute.xlu0 %1697
        %v1701 = vadd.f32 %v1687, %v1696
        %v1702 = vadd.f32 %v1688, %v1698
        %s1703 = sld [smem:[#allocation5 + $0x56]]
        %v1704 = vstv %s1703
        %v1705 = vmul.f32 %v1704, %v1681
        %v1706 = vmul.f32 %v1704, %v1682
        %1709 = vrot.lane.b32.xlu0 %v1705, 126
        %v1710 = vpop.permute.xlu0 %1709
        %1711 = vrot.lane.b32.xlu0 %v1706, 126
        %v1712 = vpop.permute.xlu0 %1711
        %v1715 = vadd.f32 %v1701, %v1710
        %v1716 = vadd.f32 %v1702, %v1712
        %s1717 = sld [smem:[#allocation5 + $0x57]]
        %v1718 = vstv %s1717
        %v1719 = vmul.f32 %v1718, %v1681
        %v1720 = vmul.f32 %v1718, %v1682
        %1723 = vrot.lane.b32.xlu0 %v1719, 125
        %v1724 = vpop.permute.xlu0 %1723
        %1725 = vrot.lane.b32.xlu0 %v1720, 125
        %v1726 = vpop.permute.xlu0 %1725
        %v1729 = vadd.f32 %v1715, %v1724
        %v1730 = vadd.f32 %v1716, %v1726
        %s1731 = sld [smem:[#allocation5 + $0x58]]
        %v1732 = vstv %s1731
        %v1733 = vmul.f32 %v1732, %v1681
        %v1734 = vmul.f32 %v1732, %v1682
        %1737 = vrot.lane.b32.xlu0 %v1733, 124
        %v1738 = vpop.permute.xlu0 %1737
        %1739 = vrot.lane.b32.xlu0 %v1734, 124
        %v1740 = vpop.permute.xlu0 %1739
        %v1743 = vadd.f32 %v1729, %v1738
        %v1744 = vadd.f32 %v1730, %v1740
        %s1745 = sld [smem:[#allocation5 + $0x59]]
        %v1746 = vstv %s1745
        %v1747 = vmul.f32 %v1746, %v1681
        %v1748 = vmul.f32 %v1746, %v1682
        %1751 = vrot.lane.b32.xlu0 %v1747, 123
        %v1752 = vpop.permute.xlu0 %1751
        %1753 = vrot.lane.b32.xlu0 %v1748, 123
        %v1754 = vpop.permute.xlu0 %1753
        %v1757 = vadd.f32 %v1743, %v1752
        %v1758 = vadd.f32 %v1744, %v1754
        %s1759 = sld [smem:[#allocation5 + $0x5a]]
        %v1760 = vstv %s1759
        %v1761 = vmul.f32 %v1760, %v1681
        %v1762 = vmul.f32 %v1760, %v1682
        %1765 = vrot.lane.b32.xlu0 %v1761, 122
        %v1766 = vpop.permute.xlu0 %1765
        %1767 = vrot.lane.b32.xlu0 %v1762, 122
        %v1768 = vpop.permute.xlu0 %1767
        %v1771 = vadd.f32 %v1757, %v1766
        %v1772 = vadd.f32 %v1758, %v1768
        %v1773 = vld [vmem:[%s425 + $0x6] sm:$0xff]
        %v1774 = vld [vmem:[%s425 + $0xe] sm:$0xff]
        %s1775 = sld [smem:[#allocation5 + $0x5b]]
        %v1776 = vstv %s1775
        %v1777 = vmul.f32 %v1776, %v1773
        %v1778 = vmul.f32 %v1776, %v1774
        %v1779 = vadd.f32 %v1771, %v1777
        %v1780 = vadd.f32 %v1772, %v1778
        %s1781 = sld [smem:[#allocation5 + $0x5c]]
        %v1782 = vstv %s1781
        %v1783 = vmul.f32 %v1782, %v1773
        %v1784 = vmul.f32 %v1782, %v1774
        %1787 = vrot.lane.b32.xlu0 %v1783, 127
        %v1788 = vpop.permute.xlu0 %1787
        %1789 = vrot.lane.b32.xlu0 %v1784, 127
        %v1790 = vpop.permute.xlu0 %1789
        %v1793 = vadd.f32 %v1779, %v1788
        %v1794 = vadd.f32 %v1780, %v1790
        %s1795 = sld [smem:[#allocation5 + $0x5d]]
        %v1796 = vstv %s1795
        %v1797 = vmul.f32 %v1796, %v1773
        %v1798 = vmul.f32 %v1796, %v1774
        %1801 = vrot.lane.b32.xlu0 %v1797, 126
        %v1802 = vpop.permute.xlu0 %1801
        %1803 = vrot.lane.b32.xlu0 %v1798, 126
        %v1804 = vpop.permute.xlu0 %1803
        %v1807 = vadd.f32 %v1793, %v1802
        %v1808 = vadd.f32 %v1794, %v1804
        %s1809 = sld [smem:[#allocation5 + $0x5e]]
        %v1810 = vstv %s1809
        %v1811 = vmul.f32 %v1810, %v1773
        %v1812 = vmul.f32 %v1810, %v1774
        %1815 = vrot.lane.b32.xlu0 %v1811, 125
        %v1816 = vpop.permute.xlu0 %1815
        %1817 = vrot.lane.b32.xlu0 %v1812, 125
        %v1818 = vpop.permute.xlu0 %1817
        %v1821 = vadd.f32 %v1807, %v1816
        %v1822 = vadd.f32 %v1808, %v1818
        %s1823 = sld [smem:[#allocation5 + $0x5f]]
        %v1824 = vstv %s1823
        %v1825 = vmul.f32 %v1824, %v1773
        %v1826 = vmul.f32 %v1824, %v1774
        %1829 = vrot.lane.b32.xlu0 %v1825, 124
        %v1830 = vpop.permute.xlu0 %1829
        %1831 = vrot.lane.b32.xlu0 %v1826, 124
        %v1832 = vpop.permute.xlu0 %1831
        %v1835 = vadd.f32 %v1821, %v1830
        %v1836 = vadd.f32 %v1822, %v1832
        %s1837 = sld [smem:[#allocation5 + $0x60]]
        %v1838 = vstv %s1837
        %v1839 = vmul.f32 %v1838, %v1773
        %v1840 = vmul.f32 %v1838, %v1774
        %1843 = vrot.lane.b32.xlu0 %v1839, 123
        %v1844 = vpop.permute.xlu0 %1843
        %1845 = vrot.lane.b32.xlu0 %v1840, 123
        %v1846 = vpop.permute.xlu0 %1845
        %v1849 = vadd.f32 %v1835, %v1844
        %v1850 = vadd.f32 %v1836, %v1846
        %s1851 = sld [smem:[#allocation5 + $0x61]]
        %v1852 = vstv %s1851
        %v1853 = vmul.f32 %v1852, %v1773
        %v1854 = vmul.f32 %v1852, %v1774
        %1857 = vrot.lane.b32.xlu0 %v1853, 122
        %v1858 = vpop.permute.xlu0 %1857
        %1859 = vrot.lane.b32.xlu0 %v1854, 122
        %v1860 = vpop.permute.xlu0 %1859
        %v1863 = vadd.f32 %v1849, %v1858
        %v1864 = vadd.f32 %v1850, %v1860
        %v1865 = vxor.u32 %v1863, 2147483648
        %v1866 = vxor.u32 %v1864, 2147483648
        %v1867 = vmul.f32 %v1865, 1.442695
        %v1868 = vpow.pop %v1867
        %v1869 = vmul.f32 %v1866, 1.442695
        %v1870 = vpow.pop %v1869
        %v1871 = vadd.f32 %v1868, 1.0
        %v1872 = vadd.f32 %v1870, 1.0
        %v1873 = vrcp.pop %v1871
        %v1874 = vmul.f32 1.0, %v1873
        %v1875 = vrcp.pop %v1872
        %v1876 = vmul.f32 1.0, %v1875
        %vm1877 = vcmask 130048
        %1878 = vst.msk [vmem:[%s171] sm:$0xff] %vm1877, %v1874
        %1879 = vst.msk [vmem:[%s171 + $0x8] sm:$0xff] %vm1877, %v1876
        %s1880 = sand.u32 %s75, 1
        %s1881 = scalar_lea.sflag [#allocation7], %s1880
        %s1882 = sand.u32 %s75, 1
        %s1883 = smul.addr %s1882, 16
        %s1884 = scalar_lea.vmem [#allocation10], %s1883
        // Predicated region
        $region37: #{tpu_custom_call.1} parent=27 // pred_check
          %p1885 = pneg %p85
        $region38: #{tpu_custom_call.1} parent=27 // pred_check_branch
          %1887 = sbr.rel (%p1885) target = $region40
        $region39: #{tpu_custom_call.1} parent=27 // pred_region
          %s1889 = ssub.s32 256, 256
          %1890 = vsyncadd %s1881, %s1889
          %s1891 = smul.addr %s20, 2
          %s1892 = smul.addr %s1891, 128
          %s1893 = scalar_lea.hbm %s2, %s1892
          %s1894 = sshll.u32 %s1884, 4
          %s1895 = int_to_ptr.vmem [resolvable:$true] %s1894
          %1900 = dma.vmem_to_hbm [thread:$0]  %s1895, 256, %s1893, %s1881, 128, 128, 8
        $region40: #{tpu_custom_call.1} parent=27 // pred_fallthru
          _
      $region28: #{tpu_custom_call.1} parent=5 // pred_fallthru
        _
      %p1901 = scmp.le.s32.totalorder 2, %s15
      // Predicated region
      $region41: #{tpu_custom_call.1} parent=5 // pred_check
        %p1902 = pneg %p1901
      $region42: #{tpu_custom_call.1} parent=5 // pred_check_branch
        %1904 = sbr.rel (%p1902) target = $region44
      $region43: #{tpu_custom_call.1} parent=5 // pred_region
        %s1905 = ssub.s32 %s15, 2
        // Predicated region
        $region45: #{tpu_custom_call.1} parent=43 // pred_check
          %p1906 = pneg %p91
        $region46: #{tpu_custom_call.1} parent=43 // pred_check_branch
          %1908 = sbr.rel (%p1906) target = $region48
        $region47: #{tpu_custom_call.1} parent=43 // pred_region
          %s1909 = sand.u32 %s76, 1
          %s1910 = scalar_lea.sflag [#allocation7], %s1909
          %s1911 = sand.u32 %s76, 1
          %s1912 = smul.addr %s1911, 16
          %s1913 = scalar_lea.vmem [#allocation10], %s1912
          %1914 = dma.done %s1910, 256
        $region48: #{tpu_custom_call.1} parent=43 // pred_fallthru
          _
      $region44: #{tpu_custom_call.1} parent=5 // pred_fallthru
        _
    $region6: #{tpu_custom_call.1} parent=1 // loop_footer
      %s19 = sadd.s32 1, %s15
    $region7: #{tpu_custom_call.1} parent=1 // loop_footer_branch
      %14 = sbr.rel target = $region3
    $region8: #{tpu_custom_call.1} parent=1 // loop_exit
      _
    %1915 = vsyncpa [#allocation6], 1
    %s1916 = scalar_lea.sflag [#allocation6], 1
    %1917 = vsyncpa %s1916, 1
    %1918 = vsyncpa [#allocation7], 1
    %s1919 = scalar_lea.sflag [#allocation7], 1
    %1920 = vsyncpa %s1919, 1
    %1921 = vsyncpa [#allocation8], 1
    %s1922 = scalar_lea.sflag [#allocation8], 1
    %1923 = vsyncpa %s1922, 1

</llo_original>
